<compile_context>
chip_gen: v5e
topology: v5e:2x2
jax: 0.10.0
libtpu: 0.0.40
codegen_flags: <defaults>
</compile_context>

<pallas_src>
import math
import numpy as np

import jax
import jax.numpy as jnp
from jax.experimental import pallas as pl
from jax.experimental.pallas import tpu as pltpu

KERNLEN = 17
PAD = 8  # padding=8 in F.conv2d -> "same" output for a 17x17 kernel


def gauss_kernel_np(kernlen=15, nsig=3, channels=1):
    """Faithful re-implementation of the module's gauss_kernel (scipy-free)."""
    interval = (2 * nsig + 1.0) / kernlen
    x = np.linspace(-nsig - interval / 2.0, nsig + interval / 2.0, kernlen + 1)
    # st.norm.cdf(x) == 0.5 * (1 + erf(x / sqrt(2)))
    cdf = np.array([0.5 * (1.0 + math.erf(v / math.sqrt(2.0))) for v in x],
                   dtype=np.float64)
    kern1d = np.diff(cdf)
    kernel_raw = np.sqrt(np.outer(kern1d, kern1d))
    kernel = kernel_raw / kernel_raw.sum()
    out_filter = np.array(kernel, dtype=np.float32)
    out_filter = out_filter.reshape((1, 1, kernlen, kernlen))
    out_filter = np.repeat(out_filter, channels, axis=2)
    return out_filter  # (1, 1, 17, 17) for channels=1


def _round_up(v, m):
    return ((v + m - 1) // m) * m


def _band_matrices(k2d, tile_h):
    """S[dx, y, r] = k2d[r - y, dx] for 0 <= r - y < 17 else 0.  Shape (17, TH, TH+16)."""
    th_in = tile_h + 2 * PAD
    y = jnp.arange(tile_h)[:, None]          # (TH, 1)
    r = jnp.arange(th_in)[None, :]           # (1, TH+16)
    dy = r - y                               # (TH, TH+16)
    valid = (dy >= 0) & (dy < KERNLEN)
    dy_c = jnp.clip(dy, 0, KERNLEN - 1)
    k_t = jnp.transpose(k2d)                 # (17_dx, 17_dy)
    s = jnp.where(valid[None, :, :], k_t[:, dy_c], jnp.float32(0.0))
    return s.astype(jnp.float32)             # (17, TH, TH+16)


def _blur_kernel(s_ref, xpad_hbm, o_ref, slab_ref, sem):
    """One (batch, H-tile) per grid step.

    s_ref    : VMEM (17, TH, TH+16) f32 banded Toeplitz matrices built from the conv kernel
    xpad_hbm : HBM  (N, H_pad+16, Win) f32 zero-padded, lane-aligned input (memory_space=ANY)
    o_ref    : VMEM (1, TH, Wout) f32 output tile (Wout multiple of 128 -> lane-dense stores)
    slab_ref : VMEM (1, TH+16, Win) f32 halo'd input slab (manual DMA)
    sem      : DMA semaphore
    """
    n = pl.program_id(0)
    ti = pl.program_id(1)
    tile_h = o_ref.shape[1]
    w_out = o_ref.shape[2]
    th_in = tile_h + 2 * PAD

    row0 = pl.multiple_of(ti * tile_h, 8)
    cp = pltpu.make_async_copy(
        xpad_hbm.at[pl.ds(n, 1), pl.ds(row0, th_in), :],
        slab_ref,
        sem)
    cp.start()
    cp.wait()

    # out[y, x] = sum_dx (S[dx] @ slab[:, dx:dx+Wout])[y, x]
    #           = sum_dx sum_dy k[dy, dx] * slab[y+dy, x+dx]     (cross-correlation, like F.conv2d)
    for dx in range(KERNLEN):
        window = slab_ref[0, :, pl.ds(dx, w_out)]                 # (TH+16, Wout)
        contrib = jnp.dot(s_ref[dx], window,
                          preferred_element_type=jnp.float32)     # MXU: (TH, Wout)
        if dx == 0:
            o_ref[0] = contrib
        else:
            o_ref[0] += contrib


def degradation_forward(x, kernel, *, tile_h=256):
    """x: (N, 1, H, W) float32, kernel: (1, 1, 17, 17) float32 -> (N, 1, H, W) float32."""
    N, C, H, W = x.shape
    assert C == 1, "Degradation_Model kernel is single-channel (1,1,17,17)"
    k2d = kernel.reshape(KERNLEN, KERNLEN).astype(jnp.float32)

    # Tile sizes: TH multiple of 8; output lane width a multiple of 128; input lane width
    # a multiple of 128 with >= 16 columns of halo headroom.
    TH = min(int(tile_h), _round_up(H, 8))
    num_h_tiles = -(-H // TH)
    H_pad = num_h_tiles * TH
    Wout = _round_up(W, 128)
    Win = Wout + 128

    # Glue: squeeze channel; zero-pad H by (8, 8 + align), W by (8, align).  The left/top pad
    # of 8 reproduces F.conv2d's padding=8; the extra right/bottom pad is zero so the padded
    # output columns/rows are simply discarded below.
    x_nhw = x[:, 0, :, :].astype(jnp.float32)                       # (N, H, W)
    x_pad = jnp.pad(
        x_nhw,
        ((0, 0),
         (PAD, PAD + (H_pad - H)),
         (PAD, Win - W - PAD)))                                     # (N, H_pad+16, Win)

    S = _band_matrices(k2d, TH)                                     # (17, TH, TH+16)

    flops = 2.0 * KERNLEN * (TH + 2 * PAD) * N * H_pad * Wout
    bytes_accessed = (4.0 * N * (H_pad + 2 * PAD) * Win            # padded input read
                      + 4.0 * N * H_pad * Wout                     # output write
                      + 4.0 * KERNLEN * TH * (TH + 2 * PAD))       # band matrices

    out_pad = pl.pallas_call(
        _blur_kernel,
        out_shape=jax.ShapeDtypeStruct((N, H_pad, Wout), jnp.float32),
        grid=(N, num_h_tiles),
        in_specs=[
            pl.BlockSpec((KERNLEN, TH, TH + 2 * PAD), lambda n, i: (0, 0, 0)),
            pl.BlockSpec(memory_space=pl.ANY),       # raw HBM ref; halo slab DMA'd manually
        ],
        out_specs=pl.BlockSpec((1, TH, Wout), lambda n, i: (n, i, 0)),
        scratch_shapes=[
            pltpu.VMEM((1, TH + 2 * PAD, Win), jnp.float32),
            pltpu.SemaphoreType.DMA(()),
        ],
        compiler_params=pltpu.CompilerParams(
            dimension_semantics=("parallel", "parallel"),
            vmem_limit_bytes=48 * 1024 * 1024),
        cost_estimate=pl.CostEstimate(
            flops=int(flops),
            transcendentals=0,
            bytes_accessed=int(bytes_accessed)),
    )(S, x_pad)

    return out_pad[:, :H, :W][:, None, :, :]                       # back to NCHW


def degradation_reference(x, kernel):
    """Pure-JAX reference of F.conv2d(x, kernel, stride=1, padding=8)."""
    return jax.lax.conv_general_dilated(
        x.astype(jnp.float32), kernel.astype(jnp.float32),
        window_strides=(1, 1), padding=((PAD, PAD), (PAD, PAD)),
        dimension_numbers=("NCHW", "OIHW", "NCHW"))


if __name__ == "__main__":
    # Deterministic parameter init: exactly what Degradation_Model.__init__ computes.
    init_kernel = jnp.asarray(gauss_kernel_np(kernlen=17, nsig=3, channels=1))  # (1,1,17,17)

    # Small deterministic input, NCHW with C=1 (required by the (1,1,17,17) conv weight).
    key = jax.random.PRNGKey(0)
    x = jax.random.normal(key, (2, 1, 16, 16), dtype=jnp.float32)

    out = degradation_forward(x, init_kernel)
    out = jax.block_until_ready(out)

    ref = jax.block_until_ready(degradation_reference(x, init_kernel))
    assert out.shape == (2, 1, 16, 16), out.shape
    max_err = float(jnp.max(jnp.abs(out - ref)))
    assert jnp.allclose(out, ref, atol=3e-3, rtol=3e-3), max_err

    print("KERNEL_OK")
</pallas_src>

<mosaic_0001>
module attributes {stable_mosaic.version = 11 : i64} {
  func.func @_blur_kernel(%arg0: i32, %arg1: i32, %arg2: memref<17x16x32xf32, #tpu.memory_space<vmem>>, %arg3: memref<2x32x256xf32, #tpu.memory_space<any>>, %arg4: memref<1x16x128xf32, #tpu.memory_space<vmem>>, %arg5: memref<1x32x256xf32, #tpu.memory_space<vmem>>, %arg6: memref<!tpu.dma_semaphore, #tpu.memory_space<semaphore_mem>>) attributes {dimension_semantics = [#tpu.dimension_semantics<parallel>, #tpu.dimension_semantics<parallel>], iteration_bounds = array<i64: 2, 1>, scalar_prefetch = 0 : i64, scratch_operands = 2 : i64, tpu.core_type = #tpu.core_type<tc>, window_params = [{pipeline_mode = #tpu.pipeline_mode<synchronous>, transform_indices = @transform_0, window_bounds = array<i64: 17, 16, 32>}, {}, {transform_indices = @transform_2, window_bounds = array<i64: 1, 16, 128>}]} {
    %c16_i32 = arith.constant 16 : i32
    %0 = arith.muli %arg1, %c16_i32 : i32
    %1 = tpu.assume_multiple %0, 8 : i32
    %c0_i32 = arith.constant 0 : i32
    %2 = tpu.memref_slice %arg3[%arg0, %1, %c0_i32] : memref<2x32x256xf32, #tpu.memory_space<any>> -> memref<1x32x256xf32, #tpu.memory_space<any>>
    tpu.enqueue_dma source(%2 : memref<1x32x256xf32, #tpu.memory_space<any>>) target(%arg5 : memref<1x32x256xf32, #tpu.memory_space<vmem>>) target_semaphore(%arg6 : memref<!tpu.dma_semaphore, #tpu.memory_space<semaphore_mem>>)
    %c0_i32_0 = arith.constant 0 : i32
    %3 = tpu.memref_slice %arg3[%arg0, %1, %c0_i32_0] : memref<2x32x256xf32, #tpu.memory_space<any>> -> memref<1x32x256xf32, #tpu.memory_space<any>>
    tpu.wait_dma2 semaphore(%arg6 : memref<!tpu.dma_semaphore, #tpu.memory_space<semaphore_mem>>) src(%3 : memref<1x32x256xf32, #tpu.memory_space<any>>) dst(%arg5 : memref<1x32x256xf32, #tpu.memory_space<vmem>>)
    %c0 = arith.constant 0 : index
    %c0_1 = arith.constant 0 : index
    %c0_2 = arith.constant 0 : index
    %4 = vector.load %arg5[%c0, %c0_1, %c0_2] : memref<1x32x256xf32, #tpu.memory_space<vmem>>, vector<1x32x128xf32>
    %5 = vector.shape_cast %4 : vector<1x32x128xf32> to vector<32x128xf32>
    %c0_3 = arith.constant 0 : index
    %c0_4 = arith.constant 0 : index
    %c0_5 = arith.constant 0 : index
    %6 = vector.load %arg2[%c0_3, %c0_4, %c0_5] : memref<17x16x32xf32, #tpu.memory_space<vmem>>, vector<1x16x32xf32>
    %7 = vector.shape_cast %6 : vector<1x16x32xf32> to vector<16x32xf32>
    %cst = arith.constant dense<0.000000e+00> : vector<16x128xf32>
    %8 = tpu.matmul %7, %5, %cst {dimension_numbers = #tpu.dot_dimension_numbers<[1], [0], [0], [1], [0, 0, 1, 1], [], []>} : vector<16x32xf32>, vector<32x128xf32>, vector<16x128xf32> -> vector<16x128xf32>
    %c0_6 = arith.constant 0 : index
    %c0_7 = arith.constant 0 : index
    %c0_8 = arith.constant 0 : index
    %9 = vector.load %arg4[%c0_6, %c0_7, %c0_8] : memref<1x16x128xf32, #tpu.memory_space<vmem>>, vector<1x16x128xf32>
    %10 = vector.shape_cast %9 : vector<1x16x128xf32> to vector<16x128xf32>
    %11 = vector.shape_cast %8 : vector<16x128xf32> to vector<1x16x128xf32>
    tpu.vector_store %arg4[%c0_6, %c0_7, %c0_8], %11 {strides = array<i32>} : memref<1x16x128xf32, #tpu.memory_space<vmem>>, vector<1x16x128xf32>,
    %c0_9 = arith.constant 0 : index
    %c0_10 = arith.constant 0 : index
    %c1 = arith.constant 1 : index
    %12 = vector.load %arg5[%c0_9, %c0_10, %c1] : memref<1x32x256xf32, #tpu.memory_space<vmem>>, vector<1x32x128xf32>
    %13 = vector.shape_cast %12 : vector<1x32x128xf32> to vector<32x128xf32>
    %c1_11 = arith.constant 1 : index
    %c0_12 = arith.constant 0 : index
    %c0_13 = arith.constant 0 : index
    %14 = vector.load %arg2[%c1_11, %c0_12, %c0_13] : memref<17x16x32xf32, #tpu.memory_space<vmem>>, vector<1x16x32xf32>
    %15 = vector.shape_cast %14 : vector<1x16x32xf32> to vector<16x32xf32>
    %cst_14 = arith.constant dense<0.000000e+00> : vector<16x128xf32>
    %16 = tpu.matmul %15, %13, %cst_14 {dimension_numbers = #tpu.dot_dimension_numbers<[1], [0], [0], [1], [0, 0, 1, 1], [], []>} : vector<16x32xf32>, vector<32x128xf32>, vector<16x128xf32> -> vector<16x128xf32>
    %c0_15 = arith.constant 0 : index
    %c0_16 = arith.constant 0 : index
    %c0_17 = arith.constant 0 : index
    %17 = vector.load %arg4[%c0_15, %c0_16, %c0_17] : memref<1x16x128xf32, #tpu.memory_space<vmem>>, vector<1x16x128xf32>
    %18 = vector.shape_cast %17 : vector<1x16x128xf32> to vector<16x128xf32>
    %19 = arith.addf %18, %16 : vector<16x128xf32>
    %c0_18 = arith.constant 0 : index
    %c0_19 = arith.constant 0 : index
    %c0_20 = arith.constant 0 : index
    %20 = vector.load %arg4[%c0_18, %c0_19, %c0_20] : memref<1x16x128xf32, #tpu.memory_space<vmem>>, vector<1x16x128xf32>
    %21 = vector.shape_cast %20 : vector<1x16x128xf32> to vector<16x128xf32>
    %22 = vector.shape_cast %19 : vector<16x128xf32> to vector<1x16x128xf32>
    tpu.vector_store %arg4[%c0_18, %c0_19, %c0_20], %22 {strides = array<i32>} : memref<1x16x128xf32, #tpu.memory_space<vmem>>, vector<1x16x128xf32>,
    %c0_21 = arith.constant 0 : index
    %c0_22 = arith.constant 0 : index
    %c2 = arith.constant 2 : index
    %23 = vector.load %arg5[%c0_21, %c0_22, %c2] : memref<1x32x256xf32, #tpu.memory_space<vmem>>, vector<1x32x128xf32>
    %24 = vector.shape_cast %23 : vector<1x32x128xf32> to vector<32x128xf32>
    %c2_23 = arith.constant 2 : index
    %c0_24 = arith.constant 0 : index
    %c0_25 = arith.constant 0 : index
    %25 = vector.load %arg2[%c2_23, %c0_24, %c0_25] : memref<17x16x32xf32, #tpu.memory_space<vmem>>, vector<1x16x32xf32>
    %26 = vector.shape_cast %25 : vector<1x16x32xf32> to vector<16x32xf32>
    %cst_26 = arith.constant dense<0.000000e+00> : vector<16x128xf32>
    %27 = tpu.matmul %26, %24, %cst_26 {dimension_numbers = #tpu.dot_dimension_numbers<[1], [0], [0], [1], [0, 0, 1, 1], [], []>} : vector<16x32xf32>, vector<32x128xf32>, vector<16x128xf32> -> vector<16x128xf32>
    %c0_27 = arith.constant 0 : index
    %c0_28 = arith.constant 0 : index
    %c0_29 = arith.constant 0 : index
    %28 = vector.load %arg4[%c0_27, %c0_28, %c0_29] : memref<1x16x128xf32, #tpu.memory_space<vmem>>, vector<1x16x128xf32>
    %29 = vector.shape_cast %28 : vector<1x16x128xf32> to vector<16x128xf32>
    %30 = arith.addf %29, %27 : vector<16x128xf32>
    %c0_30 = arith.constant 0 : index
    %c0_31 = arith.constant 0 : index
    %c0_32 = arith.constant 0 : index
    %31 = vector.load %arg4[%c0_30, %c0_31, %c0_32] : memref<1x16x128xf32, #tpu.memory_space<vmem>>, vector<1x16x128xf32>
    %32 = vector.shape_cast %31 : vector<1x16x128xf32> to vector<16x128xf32>
    %33 = vector.shape_cast %30 : vector<16x128xf32> to vector<1x16x128xf32>
    tpu.vector_store %arg4[%c0_30, %c0_31, %c0_32], %33 {strides = array<i32>} : memref<1x16x128xf32, #tpu.memory_space<vmem>>, vector<1x16x128xf32>,
    %c0_33 = arith.constant 0 : index
    %c0_34 = arith.constant 0 : index
    %c3 = arith.constant 3 : index
    %34 = vector.load %arg5[%c0_33, %c0_34, %c3] : memref<1x32x256xf32, #tpu.memory_space<vmem>>, vector<1x32x128xf32>
    %35 = vector.shape_cast %34 : vector<1x32x128xf32> to vector<32x128xf32>
    %c3_35 = arith.constant 3 : index
    %c0_36 = arith.constant 0 : index
    %c0_37 = arith.constant 0 : index
    %36 = vector.load %arg2[%c3_35, %c0_36, %c0_37] : memref<17x16x32xf32, #tpu.memory_space<vmem>>, vector<1x16x32xf32>
    %37 = vector.shape_cast %36 : vector<1x16x32xf32> to vector<16x32xf32>
    %cst_38 = arith.constant dense<0.000000e+00> : vector<16x128xf32>
    %38 = tpu.matmul %37, %35, %cst_38 {dimension_numbers = #tpu.dot_dimension_numbers<[1], [0], [0], [1], [0, 0, 1, 1], [], []>} : vector<16x32xf32>, vector<32x128xf32>, vector<16x128xf32> -> vector<16x128xf32>
    %c0_39 = arith.constant 0 : index
    %c0_40 = arith.constant 0 : index
    %c0_41 = arith.constant 0 : index
    %39 = vector.load %arg4[%c0_39, %c0_40, %c0_41] : memref<1x16x128xf32, #tpu.memory_space<vmem>>, vector<1x16x128xf32>
    %40 = vector.shape_cast %39 : vector<1x16x128xf32> to vector<16x128xf32>
    %41 = arith.addf %40, %38 : vector<16x128xf32>
    %c0_42 = arith.constant 0 : index
    %c0_43 = arith.constant 0 : index
    %c0_44 = arith.constant 0 : index
    %42 = vector.load %arg4[%c0_42, %c0_43, %c0_44] : memref<1x16x128xf32, #tpu.memory_space<vmem>>, vector<1x16x128xf32>
    %43 = vector.shape_cast %42 : vector<1x16x128xf32> to vector<16x128xf32>
    %44 = vector.shape_cast %41 : vector<16x128xf32> to vector<1x16x128xf32>
    tpu.vector_store %arg4[%c0_42, %c0_43, %c0_44], %44 {strides = array<i32>} : memref<1x16x128xf32, #tpu.memory_space<vmem>>, vector<1x16x128xf32>,
    %c0_45 = arith.constant 0 : index
    %c0_46 = arith.constant 0 : index
    %c4 = arith.constant 4 : index
    %45 = vector.load %arg5[%c0_45, %c0_46, %c4] : memref<1x32x256xf32, #tpu.memory_space<vmem>>, vector<1x32x128xf32>
    %46 = vector.shape_cast %45 : vector<1x32x128xf32> to vector<32x128xf32>
    %c4_47 = arith.constant 4 : index
    %c0_48 = arith.constant 0 : index
    %c0_49 = arith.constant 0 : index
    %47 = vector.load %arg2[%c4_47, %c0_48, %c0_49] : memref<17x16x32xf32, #tpu.memory_space<vmem>>, vector<1x16x32xf32>
    %48 = vector.shape_cast %47 : vector<1x16x32xf32> to vector<16x32xf32>
    %cst_50 = arith.constant dense<0.000000e+00> : vector<16x128xf32>
    %49 = tpu.matmul %48, %46, %cst_50 {dimension_numbers = #tpu.dot_dimension_numbers<[1], [0], [0], [1], [0, 0, 1, 1], [], []>} : vector<16x32xf32>, vector<32x128xf32>, vector<16x128xf32> -> vector<16x128xf32>
    %c0_51 = arith.constant 0 : index
    %c0_52 = arith.constant 0 : index
    %c0_53 = arith.constant 0 : index
    %50 = vector.load %arg4[%c0_51, %c0_52, %c0_53] : memref<1x16x128xf32, #tpu.memory_space<vmem>>, vector<1x16x128xf32>
    %51 = vector.shape_cast %50 : vector<1x16x128xf32> to vector<16x128xf32>
    %52 = arith.addf %51, %49 : vector<16x128xf32>
    %c0_54 = arith.constant 0 : index
    %c0_55 = arith.constant 0 : index
    %c0_56 = arith.constant 0 : index
    %53 = vector.load %arg4[%c0_54, %c0_55, %c0_56] : memref<1x16x128xf32, #tpu.memory_space<vmem>>, vector<1x16x128xf32>
    %54 = vector.shape_cast %53 : vector<1x16x128xf32> to vector<16x128xf32>
    %55 = vector.shape_cast %52 : vector<16x128xf32> to vector<1x16x128xf32>
    tpu.vector_store %arg4[%c0_54, %c0_55, %c0_56], %55 {strides = array<i32>} : memref<1x16x128xf32, #tpu.memory_space<vmem>>, vector<1x16x128xf32>,
    %c0_57 = arith.constant 0 : index
    %c0_58 = arith.constant 0 : index
    %c5 = arith.constant 5 : index
    %56 = vector.load %arg5[%c0_57, %c0_58, %c5] : memref<1x32x256xf32, #tpu.memory_space<vmem>>, vector<1x32x128xf32>
    %57 = vector.shape_cast %56 : vector<1x32x128xf32> to vector<32x128xf32>
    %c5_59 = arith.constant 5 : index
    %c0_60 = arith.constant 0 : index
    %c0_61 = arith.constant 0 : index
    %58 = vector.load %arg2[%c5_59, %c0_60, %c0_61] : memref<17x16x32xf32, #tpu.memory_space<vmem>>, vector<1x16x32xf32>
    %59 = vector.shape_cast %58 : vector<1x16x32xf32> to vector<16x32xf32>
    %cst_62 = arith.constant dense<0.000000e+00> : vector<16x128xf32>
    %60 = tpu.matmul %59, %57, %cst_62 {dimension_numbers = #tpu.dot_dimension_numbers<[1], [0], [0], [1], [0, 0, 1, 1], [], []>} : vector<16x32xf32>, vector<32x128xf32>, vector<16x128xf32> -> vector<16x128xf32>
    %c0_63 = arith.constant 0 : index
    %c0_64 = arith.constant 0 : index
    %c0_65 = arith.constant 0 : index
    %61 = vector.load %arg4[%c0_63, %c0_64, %c0_65] : memref<1x16x128xf32, #tpu.memory_space<vmem>>, vector<1x16x128xf32>
    %62 = vector.shape_cast %61 : vector<1x16x128xf32> to vector<16x128xf32>
    %63 = arith.addf %62, %60 : vector<16x128xf32>
    %c0_66 = arith.constant 0 : index
    %c0_67 = arith.constant 0 : index
    %c0_68 = arith.constant 0 : index
    %64 = vector.load %arg4[%c0_66, %c0_67, %c0_68] : memref<1x16x128xf32, #tpu.memory_space<vmem>>, vector<1x16x128xf32>
    %65 = vector.shape_cast %64 : vector<1x16x128xf32> to vector<16x128xf32>
    %66 = vector.shape_cast %63 : vector<16x128xf32> to vector<1x16x128xf32>
    tpu.vector_store %arg4[%c0_66, %c0_67, %c0_68], %66 {strides = array<i32>} : memref<1x16x128xf32, #tpu.memory_space<vmem>>, vector<1x16x128xf32>,
    %c0_69 = arith.constant 0 : index
    %c0_70 = arith.constant 0 : index
    %c6 = arith.constant 6 : index
    %67 = vector.load %arg5[%c0_69, %c0_70, %c6] : memref<1x32x256xf32, #tpu.memory_space<vmem>>, vector<1x32x128xf32>
    %68 = vector.shape_cast %67 : vector<1x32x128xf32> to vector<32x128xf32>
    %c6_71 = arith.constant 6 : index
    %c0_72 = arith.constant 0 : index
    %c0_73 = arith.constant 0 : index
    %69 = vector.load %arg2[%c6_71, %c0_72, %c0_73] : memref<17x16x32xf32, #tpu.memory_space<vmem>>, vector<1x16x32xf32>
    %70 = vector.shape_cast %69 : vector<1x16x32xf32> to vector<16x32xf32>
    %cst_74 = arith.constant dense<0.000000e+00> : vector<16x128xf32>
    %71 = tpu.matmul %70, %68, %cst_74 {dimension_numbers = #tpu.dot_dimension_numbers<[1], [0], [0], [1], [0, 0, 1, 1], [], []>} : vector<16x32xf32>, vector<32x128xf32>, vector<16x128xf32> -> vector<16x128xf32>
    %c0_75 = arith.constant 0 : index
    %c0_76 = arith.constant 0 : index
    %c0_77 = arith.constant 0 : index
    %72 = vector.load %arg4[%c0_75, %c0_76, %c0_77] : memref<1x16x128xf32, #tpu.memory_space<vmem>>, vector<1x16x128xf32>
    %73 = vector.shape_cast %72 : vector<1x16x128xf32> to vector<16x128xf32>
    %74 = arith.addf %73, %71 : vector<16x128xf32>
    %c0_78 = arith.constant 0 : index
    %c0_79 = arith.constant 0 : index
    %c0_80 = arith.constant 0 : index
    %75 = vector.load %arg4[%c0_78, %c0_79, %c0_80] : memref<1x16x128xf32, #tpu.memory_space<vmem>>, vector<1x16x128xf32>
    %76 = vector.shape_cast %75 : vector<1x16x128xf32> to vector<16x128xf32>
    %77 = vector.shape_cast %74 : vector<16x128xf32> to vector<1x16x128xf32>
    tpu.vector_store %arg4[%c0_78, %c0_79, %c0_80], %77 {strides = array<i32>} : memref<1x16x128xf32, #tpu.memory_space<vmem>>, vector<1x16x128xf32>,
    %c0_81 = arith.constant 0 : index
    %c0_82 = arith.constant 0 : index
    %c7 = arith.constant 7 : index
    %78 = vector.load %arg5[%c0_81, %c0_82, %c7] : memref<1x32x256xf32, #tpu.memory_space<vmem>>, vector<1x32x128xf32>
    %79 = vector.shape_cast %78 : vector<1x32x128xf32> to vector<32x128xf32>
    %c7_83 = arith.constant 7 : index
    %c0_84 = arith.constant 0 : index
    %c0_85 = arith.constant 0 : index
    %80 = vector.load %arg2[%c7_83, %c0_84, %c0_85] : memref<17x16x32xf32, #tpu.memory_space<vmem>>, vector<1x16x32xf32>
    %81 = vector.shape_cast %80 : vector<1x16x32xf32> to vector<16x32xf32>
    %cst_86 = arith.constant dense<0.000000e+00> : vector<16x128xf32>
    %82 = tpu.matmul %81, %79, %cst_86 {dimension_numbers = #tpu.dot_dimension_numbers<[1], [0], [0], [1], [0, 0, 1, 1], [], []>} : vector<16x32xf32>, vector<32x128xf32>, vector<16x128xf32> -> vector<16x128xf32>
    %c0_87 = arith.constant 0 : index
    %c0_88 = arith.constant 0 : index
    %c0_89 = arith.constant 0 : index
    %83 = vector.load %arg4[%c0_87, %c0_88, %c0_89] : memref<1x16x128xf32, #tpu.memory_space<vmem>>, vector<1x16x128xf32>
    %84 = vector.shape_cast %83 : vector<1x16x128xf32> to vector<16x128xf32>
    %85 = arith.addf %84, %82 : vector<16x128xf32>
    %c0_90 = arith.constant 0 : index
    %c0_91 = arith.constant 0 : index
    %c0_92 = arith.constant 0 : index
    %86 = vector.load %arg4[%c0_90, %c0_91, %c0_92] : memref<1x16x128xf32, #tpu.memory_space<vmem>>, vector<1x16x128xf32>
    %87 = vector.shape_cast %86 : vector<1x16x128xf32> to vector<16x128xf32>
    %88 = vector.shape_cast %85 : vector<16x128xf32> to vector<1x16x128xf32>
    tpu.vector_store %arg4[%c0_90, %c0_91, %c0_92], %88 {strides = array<i32>} : memref<1x16x128xf32, #tpu.memory_space<vmem>>, vector<1x16x128xf32>,
    %c0_93 = arith.constant 0 : index
    %c0_94 = arith.constant 0 : index
    %c8 = arith.constant 8 : index
    %89 = vector.load %arg5[%c0_93, %c0_94, %c8] : memref<1x32x256xf32, #tpu.memory_space<vmem>>, vector<1x32x128xf32>
    %90 = vector.shape_cast %89 : vector<1x32x128xf32> to vector<32x128xf32>
    %c8_95 = arith.constant 8 : index
    %c0_96 = arith.constant 0 : index
    %c0_97 = arith.constant 0 : index
    %91 = vector.load %arg2[%c8_95, %c0_96, %c0_97] : memref<17x16x32xf32, #tpu.memory_space<vmem>>, vector<1x16x32xf32>
    %92 = vector.shape_cast %91 : vector<1x16x32xf32> to vector<16x32xf32>
    %cst_98 = arith.constant dense<0.000000e+00> : vector<16x128xf32>
    %93 = tpu.matmul %92, %90, %cst_98 {dimension_numbers = #tpu.dot_dimension_numbers<[1], [0], [0], [1], [0, 0, 1, 1], [], []>} : vector<16x32xf32>, vector<32x128xf32>, vector<16x128xf32> -> vector<16x128xf32>
    %c0_99 = arith.constant 0 : index
    %c0_100 = arith.constant 0 : index
    %c0_101 = arith.constant 0 : index
    %94 = vector.load %arg4[%c0_99, %c0_100, %c0_101] : memref<1x16x128xf32, #tpu.memory_space<vmem>>, vector<1x16x128xf32>
    %95 = vector.shape_cast %94 : vector<1x16x128xf32> to vector<16x128xf32>
    %96 = arith.addf %95, %93 : vector<16x128xf32>
    %c0_102 = arith.constant 0 : index
    %c0_103 = arith.constant 0 : index
    %c0_104 = arith.constant 0 : index
    %97 = vector.load %arg4[%c0_102, %c0_103, %c0_104] : memref<1x16x128xf32, #tpu.memory_space<vmem>>, vector<1x16x128xf32>
    %98 = vector.shape_cast %97 : vector<1x16x128xf32> to vector<16x128xf32>
    %99 = vector.shape_cast %96 : vector<16x128xf32> to vector<1x16x128xf32>
    tpu.vector_store %arg4[%c0_102, %c0_103, %c0_104], %99 {strides = array<i32>} : memref<1x16x128xf32, #tpu.memory_space<vmem>>, vector<1x16x128xf32>,
    %c0_105 = arith.constant 0 : index
    %c0_106 = arith.constant 0 : index
    %c9 = arith.constant 9 : index
    %100 = vector.load %arg5[%c0_105, %c0_106, %c9] : memref<1x32x256xf32, #tpu.memory_space<vmem>>, vector<1x32x128xf32>
    %101 = vector.shape_cast %100 : vector<1x32x128xf32> to vector<32x128xf32>
    %c9_107 = arith.constant 9 : index
    %c0_108 = arith.constant 0 : index
    %c0_109 = arith.constant 0 : index
    %102 = vector.load %arg2[%c9_107, %c0_108, %c0_109] : memref<17x16x32xf32, #tpu.memory_space<vmem>>, vector<1x16x32xf32>
    %103 = vector.shape_cast %102 : vector<1x16x32xf32> to vector<16x32xf32>
    %cst_110 = arith.constant dense<0.000000e+00> : vector<16x128xf32>
    %104 = tpu.matmul %103, %101, %cst_110 {dimension_numbers = #tpu.dot_dimension_numbers<[1], [0], [0], [1], [0, 0, 1, 1], [], []>} : vector<16x32xf32>, vector<32x128xf32>, vector<16x128xf32> -> vector<16x128xf32>
    %c0_111 = arith.constant 0 : index
    %c0_112 = arith.constant 0 : index
    %c0_113 = arith.constant 0 : index
    %105 = vector.load %arg4[%c0_111, %c0_112, %c0_113] : memref<1x16x128xf32, #tpu.memory_space<vmem>>, vector<1x16x128xf32>
    %106 = vector.shape_cast %105 : vector<1x16x128xf32> to vector<16x128xf32>
    %107 = arith.addf %106, %104 : vector<16x128xf32>
    %c0_114 = arith.constant 0 : index
    %c0_115 = arith.constant 0 : index
    %c0_116 = arith.constant 0 : index
    %108 = vector.load %arg4[%c0_114, %c0_115, %c0_116] : memref<1x16x128xf32, #tpu.memory_space<vmem>>, vector<1x16x128xf32>
    %109 = vector.shape_cast %108 : vector<1x16x128xf32> to vector<16x128xf32>
    %110 = vector.shape_cast %107 : vector<16x128xf32> to vector<1x16x128xf32>
    tpu.vector_store %arg4[%c0_114, %c0_115, %c0_116], %110 {strides = array<i32>} : memref<1x16x128xf32, #tpu.memory_space<vmem>>, vector<1x16x128xf32>,
    %c0_117 = arith.constant 0 : index
    %c0_118 = arith.constant 0 : index
    %c10 = arith.constant 10 : index
    %111 = vector.load %arg5[%c0_117, %c0_118, %c10] : memref<1x32x256xf32, #tpu.memory_space<vmem>>, vector<1x32x128xf32>
    %112 = vector.shape_cast %111 : vector<1x32x128xf32> to vector<32x128xf32>
    %c10_119 = arith.constant 10 : index
    %c0_120 = arith.constant 0 : index
    %c0_121 = arith.constant 0 : index
    %113 = vector.load %arg2[%c10_119, %c0_120, %c0_121] : memref<17x16x32xf32, #tpu.memory_space<vmem>>, vector<1x16x32xf32>
    %114 = vector.shape_cast %113 : vector<1x16x32xf32> to vector<16x32xf32>
    %cst_122 = arith.constant dense<0.000000e+00> : vector<16x128xf32>
    %115 = tpu.matmul %114, %112, %cst_122 {dimension_numbers = #tpu.dot_dimension_numbers<[1], [0], [0], [1], [0, 0, 1, 1], [], []>} : vector<16x32xf32>, vector<32x128xf32>, vector<16x128xf32> -> vector<16x128xf32>
    %c0_123 = arith.constant 0 : index
    %c0_124 = arith.constant 0 : index
    %c0_125 = arith.constant 0 : index
    %116 = vector.load %arg4[%c0_123, %c0_124, %c0_125] : memref<1x16x128xf32, #tpu.memory_space<vmem>>, vector<1x16x128xf32>
    %117 = vector.shape_cast %116 : vector<1x16x128xf32> to vector<16x128xf32>
    %118 = arith.addf %117, %115 : vector<16x128xf32>
    %c0_126 = arith.constant 0 : index
    %c0_127 = arith.constant 0 : index
    %c0_128 = arith.constant 0 : index
    %119 = vector.load %arg4[%c0_126, %c0_127, %c0_128] : memref<1x16x128xf32, #tpu.memory_space<vmem>>, vector<1x16x128xf32>
    %120 = vector.shape_cast %119 : vector<1x16x128xf32> to vector<16x128xf32>
    %121 = vector.shape_cast %118 : vector<16x128xf32> to vector<1x16x128xf32>
    tpu.vector_store %arg4[%c0_126, %c0_127, %c0_128], %121 {strides = array<i32>} : memref<1x16x128xf32, #tpu.memory_space<vmem>>, vector<1x16x128xf32>,
    %c0_129 = arith.constant 0 : index
    %c0_130 = arith.constant 0 : index
    %c11 = arith.constant 11 : index
    %122 = vector.load %arg5[%c0_129, %c0_130, %c11] : memref<1x32x256xf32, #tpu.memory_space<vmem>>, vector<1x32x128xf32>
    %123 = vector.shape_cast %122 : vector<1x32x128xf32> to vector<32x128xf32>
    %c11_131 = arith.constant 11 : index
    %c0_132 = arith.constant 0 : index
    %c0_133 = arith.constant 0 : index
    %124 = vector.load %arg2[%c11_131, %c0_132, %c0_133] : memref<17x16x32xf32, #tpu.memory_space<vmem>>, vector<1x16x32xf32>
    %125 = vector.shape_cast %124 : vector<1x16x32xf32> to vector<16x32xf32>
    %cst_134 = arith.constant dense<0.000000e+00> : vector<16x128xf32>
    %126 = tpu.matmul %125, %123, %cst_134 {dimension_numbers = #tpu.dot_dimension_numbers<[1], [0], [0], [1], [0, 0, 1, 1], [], []>} : vector<16x32xf32>, vector<32x128xf32>, vector<16x128xf32> -> vector<16x128xf32>
    %c0_135 = arith.constant 0 : index
    %c0_136 = arith.constant 0 : index
    %c0_137 = arith.constant 0 : index
    %127 = vector.load %arg4[%c0_135, %c0_136, %c0_137] : memref<1x16x128xf32, #tpu.memory_space<vmem>>, vector<1x16x128xf32>
    %128 = vector.shape_cast %127 : vector<1x16x128xf32> to vector<16x128xf32>
    %129 = arith.addf %128, %126 : vector<16x128xf32>
    %c0_138 = arith.constant 0 : index
    %c0_139 = arith.constant 0 : index
    %c0_140 = arith.constant 0 : index
    %130 = vector.load %arg4[%c0_138, %c0_139, %c0_140] : memref<1x16x128xf32, #tpu.memory_space<vmem>>, vector<1x16x128xf32>
    %131 = vector.shape_cast %130 : vector<1x16x128xf32> to vector<16x128xf32>
    %132 = vector.shape_cast %129 : vector<16x128xf32> to vector<1x16x128xf32>
    tpu.vector_store %arg4[%c0_138, %c0_139, %c0_140], %132 {strides = array<i32>} : memref<1x16x128xf32, #tpu.memory_space<vmem>>, vector<1x16x128xf32>,
    %c0_141 = arith.constant 0 : index
    %c0_142 = arith.constant 0 : index
    %c12 = arith.constant 12 : index
    %133 = vector.load %arg5[%c0_141, %c0_142, %c12] : memref<1x32x256xf32, #tpu.memory_space<vmem>>, vector<1x32x128xf32>
    %134 = vector.shape_cast %133 : vector<1x32x128xf32> to vector<32x128xf32>
    %c12_143 = arith.constant 12 : index
    %c0_144 = arith.constant 0 : index
    %c0_145 = arith.constant 0 : index
    %135 = vector.load %arg2[%c12_143, %c0_144, %c0_145] : memref<17x16x32xf32, #tpu.memory_space<vmem>>, vector<1x16x32xf32>
    %136 = vector.shape_cast %135 : vector<1x16x32xf32> to vector<16x32xf32>
    %cst_146 = arith.constant dense<0.000000e+00> : vector<16x128xf32>
    %137 = tpu.matmul %136, %134, %cst_146 {dimension_numbers = #tpu.dot_dimension_numbers<[1], [0], [0], [1], [0, 0, 1, 1], [], []>} : vector<16x32xf32>, vector<32x128xf32>, vector<16x128xf32> -> vector<16x128xf32>
    %c0_147 = arith.constant 0 : index
    %c0_148 = arith.constant 0 : index
    %c0_149 = arith.constant 0 : index
    %138 = vector.load %arg4[%c0_147, %c0_148, %c0_149] : memref<1x16x128xf32, #tpu.memory_space<vmem>>, vector<1x16x128xf32>
    %139 = vector.shape_cast %138 : vector<1x16x128xf32> to vector<16x128xf32>
    %140 = arith.addf %139, %137 : vector<16x128xf32>
    %c0_150 = arith.constant 0 : index
    %c0_151 = arith.constant 0 : index
    %c0_152 = arith.constant 0 : index
    %141 = vector.load %arg4[%c0_150, %c0_151, %c0_152] : memref<1x16x128xf32, #tpu.memory_space<vmem>>, vector<1x16x128xf32>
    %142 = vector.shape_cast %141 : vector<1x16x128xf32> to vector<16x128xf32>
    %143 = vector.shape_cast %140 : vector<16x128xf32> to vector<1x16x128xf32>
    tpu.vector_store %arg4[%c0_150, %c0_151, %c0_152], %143 {strides = array<i32>} : memref<1x16x128xf32, #tpu.memory_space<vmem>>, vector<1x16x128xf32>,
    %c0_153 = arith.constant 0 : index
    %c0_154 = arith.constant 0 : index
    %c13 = arith.constant 13 : index
    %144 = vector.load %arg5[%c0_153, %c0_154, %c13] : memref<1x32x256xf32, #tpu.memory_space<vmem>>, vector<1x32x128xf32>
    %145 = vector.shape_cast %144 : vector<1x32x128xf32> to vector<32x128xf32>
    %c13_155 = arith.constant 13 : index
    %c0_156 = arith.constant 0 : index
    %c0_157 = arith.constant 0 : index
    %146 = vector.load %arg2[%c13_155, %c0_156, %c0_157] : memref<17x16x32xf32, #tpu.memory_space<vmem>>, vector<1x16x32xf32>
    %147 = vector.shape_cast %146 : vector<1x16x32xf32> to vector<16x32xf32>
    %cst_158 = arith.constant dense<0.000000e+00> : vector<16x128xf32>
    %148 = tpu.matmul %147, %145, %cst_158 {dimension_numbers = #tpu.dot_dimension_numbers<[1], [0], [0], [1], [0, 0, 1, 1], [], []>} : vector<16x32xf32>, vector<32x128xf32>, vector<16x128xf32> -> vector<16x128xf32>
    %c0_159 = arith.constant 0 : index
    %c0_160 = arith.constant 0 : index
    %c0_161 = arith.constant 0 : index
    %149 = vector.load %arg4[%c0_159, %c0_160, %c0_161] : memref<1x16x128xf32, #tpu.memory_space<vmem>>, vector<1x16x128xf32>
    %150 = vector.shape_cast %149 : vector<1x16x128xf32> to vector<16x128xf32>
    %151 = arith.addf %150, %148 : vector<16x128xf32>
    %c0_162 = arith.constant 0 : index
    %c0_163 = arith.constant 0 : index
    %c0_164 = arith.constant 0 : index
    %152 = vector.load %arg4[%c0_162, %c0_163, %c0_164] : memref<1x16x128xf32, #tpu.memory_space<vmem>>, vector<1x16x128xf32>
    %153 = vector.shape_cast %152 : vector<1x16x128xf32> to vector<16x128xf32>
    %154 = vector.shape_cast %151 : vector<16x128xf32> to vector<1x16x128xf32>
    tpu.vector_store %arg4[%c0_162, %c0_163, %c0_164], %154 {strides = array<i32>} : memref<1x16x128xf32, #tpu.memory_space<vmem>>, vector<1x16x128xf32>,
    %c0_165 = arith.constant 0 : index
    %c0_166 = arith.constant 0 : index
    %c14 = arith.constant 14 : index
    %155 = vector.load %arg5[%c0_165, %c0_166, %c14] : memref<1x32x256xf32, #tpu.memory_space<vmem>>, vector<1x32x128xf32>
    %156 = vector.shape_cast %155 : vector<1x32x128xf32> to vector<32x128xf32>
    %c14_167 = arith.constant 14 : index
    %c0_168 = arith.constant 0 : index
    %c0_169 = arith.constant 0 : index
    %157 = vector.load %arg2[%c14_167, %c0_168, %c0_169] : memref<17x16x32xf32, #tpu.memory_space<vmem>>, vector<1x16x32xf32>
    %158 = vector.shape_cast %157 : vector<1x16x32xf32> to vector<16x32xf32>
    %cst_170 = arith.constant dense<0.000000e+00> : vector<16x128xf32>
    %159 = tpu.matmul %158, %156, %cst_170 {dimension_numbers = #tpu.dot_dimension_numbers<[1], [0], [0], [1], [0, 0, 1, 1], [], []>} : vector<16x32xf32>, vector<32x128xf32>, vector<16x128xf32> -> vector<16x128xf32>
    %c0_171 = arith.constant 0 : index
    %c0_172 = arith.constant 0 : index
    %c0_173 = arith.constant 0 : index
    %160 = vector.load %arg4[%c0_171, %c0_172, %c0_173] : memref<1x16x128xf32, #tpu.memory_space<vmem>>, vector<1x16x128xf32>
    %161 = vector.shape_cast %160 : vector<1x16x128xf32> to vector<16x128xf32>
    %162 = arith.addf %161, %159 : vector<16x128xf32>
    %c0_174 = arith.constant 0 : index
    %c0_175 = arith.constant 0 : index
    %c0_176 = arith.constant 0 : index
    %163 = vector.load %arg4[%c0_174, %c0_175, %c0_176] : memref<1x16x128xf32, #tpu.memory_space<vmem>>, vector<1x16x128xf32>
    %164 = vector.shape_cast %163 : vector<1x16x128xf32> to vector<16x128xf32>
    %165 = vector.shape_cast %162 : vector<16x128xf32> to vector<1x16x128xf32>
    tpu.vector_store %arg4[%c0_174, %c0_175, %c0_176], %165 {strides = array<i32>} : memref<1x16x128xf32, #tpu.memory_space<vmem>>, vector<1x16x128xf32>,
    %c0_177 = arith.constant 0 : index
    %c0_178 = arith.constant 0 : index
    %c15 = arith.constant 15 : index
    %166 = vector.load %arg5[%c0_177, %c0_178, %c15] : memref<1x32x256xf32, #tpu.memory_space<vmem>>, vector<1x32x128xf32>
    %167 = vector.shape_cast %166 : vector<1x32x128xf32> to vector<32x128xf32>
    %c15_179 = arith.constant 15 : index
    %c0_180 = arith.constant 0 : index
    %c0_181 = arith.constant 0 : index
    %168 = vector.load %arg2[%c15_179, %c0_180, %c0_181] : memref<17x16x32xf32, #tpu.memory_space<vmem>>, vector<1x16x32xf32>
    %169 = vector.shape_cast %168 : vector<1x16x32xf32> to vector<16x32xf32>
    %cst_182 = arith.constant dense<0.000000e+00> : vector<16x128xf32>
    %170 = tpu.matmul %169, %167, %cst_182 {dimension_numbers = #tpu.dot_dimension_numbers<[1], [0], [0], [1], [0, 0, 1, 1], [], []>} : vector<16x32xf32>, vector<32x128xf32>, vector<16x128xf32> -> vector<16x128xf32>
    %c0_183 = arith.constant 0 : index
    %c0_184 = arith.constant 0 : index
    %c0_185 = arith.constant 0 : index
    %171 = vector.load %arg4[%c0_183, %c0_184, %c0_185] : memref<1x16x128xf32, #tpu.memory_space<vmem>>, vector<1x16x128xf32>
    %172 = vector.shape_cast %171 : vector<1x16x128xf32> to vector<16x128xf32>
    %173 = arith.addf %172, %170 : vector<16x128xf32>
    %c0_186 = arith.constant 0 : index
    %c0_187 = arith.constant 0 : index
    %c0_188 = arith.constant 0 : index
    %174 = vector.load %arg4[%c0_186, %c0_187, %c0_188] : memref<1x16x128xf32, #tpu.memory_space<vmem>>, vector<1x16x128xf32>
    %175 = vector.shape_cast %174 : vector<1x16x128xf32> to vector<16x128xf32>
    %176 = vector.shape_cast %173 : vector<16x128xf32> to vector<1x16x128xf32>
    tpu.vector_store %arg4[%c0_186, %c0_187, %c0_188], %176 {strides = array<i32>} : memref<1x16x128xf32, #tpu.memory_space<vmem>>, vector<1x16x128xf32>,
    %c0_189 = arith.constant 0 : index
    %c0_190 = arith.constant 0 : index
    %c16 = arith.constant 16 : index
    %177 = vector.load %arg5[%c0_189, %c0_190, %c16] : memref<1x32x256xf32, #tpu.memory_space<vmem>>, vector<1x32x128xf32>
    %178 = vector.shape_cast %177 : vector<1x32x128xf32> to vector<32x128xf32>
    %c16_191 = arith.constant 16 : index
    %c0_192 = arith.constant 0 : index
    %c0_193 = arith.constant 0 : index
    %179 = vector.load %arg2[%c16_191, %c0_192, %c0_193] : memref<17x16x32xf32, #tpu.memory_space<vmem>>, vector<1x16x32xf32>
    %180 = vector.shape_cast %179 : vector<1x16x32xf32> to vector<16x32xf32>
    %cst_194 = arith.constant dense<0.000000e+00> : vector<16x128xf32>
    %181 = tpu.matmul %180, %178, %cst_194 {dimension_numbers = #tpu.dot_dimension_numbers<[1], [0], [0], [1], [0, 0, 1, 1], [], []>} : vector<16x32xf32>, vector<32x128xf32>, vector<16x128xf32> -> vector<16x128xf32>
    %c0_195 = arith.constant 0 : index
    %c0_196 = arith.constant 0 : index
    %c0_197 = arith.constant 0 : index
    %182 = vector.load %arg4[%c0_195, %c0_196, %c0_197] : memref<1x16x128xf32, #tpu.memory_space<vmem>>, vector<1x16x128xf32>
    %183 = vector.shape_cast %182 : vector<1x16x128xf32> to vector<16x128xf32>
    %184 = arith.addf %183, %181 : vector<16x128xf32>
    %c0_198 = arith.constant 0 : index
    %c0_199 = arith.constant 0 : index
    %c0_200 = arith.constant 0 : index
    %185 = vector.load %arg4[%c0_198, %c0_199, %c0_200] : memref<1x16x128xf32, #tpu.memory_space<vmem>>, vector<1x16x128xf32>
    %186 = vector.shape_cast %185 : vector<1x16x128xf32> to vector<16x128xf32>
    %187 = vector.shape_cast %184 : vector<16x128xf32> to vector<1x16x128xf32>
    tpu.vector_store %arg4[%c0_198, %c0_199, %c0_200], %187 {strides = array<i32>} : memref<1x16x128xf32, #tpu.memory_space<vmem>>, vector<1x16x128xf32>,
    return
  }
  func.func @transform_0(%arg0: i32, %arg1: i32) -> (i32, i32, i32) {
    %c0_i32 = arith.constant 0 : i32
    %c0_i32_0 = arith.constant 0 : i32
    %c0_i32_1 = arith.constant 0 : i32
    %c0_i32_2 = arith.constant 0 : i32
    return %c0_i32, %c0_i32_0, %c0_i32_1 : i32, i32, i32
  }
  func.func @transform_2(%arg0: i32, %arg1: i32) -> (i32, i32, i32) {
    %c0_i32 = arith.constant 0 : i32
    %c0_i32_0 = arith.constant 0 : i32
    return %arg0, %arg1, %c0_i32 : i32, i32, i32
  }
}

</mosaic_0001>

<llo_original>
// kernel: tpu_custom_call.1
$region0: #{tpu_custom_call.1}
  #allocation0 [shape = 'u32[]', space=smem, size = 0x4, offset = 0x4, fixed_abs, tag = 'smem constant byte address 0x4 - core index']
  #allocation1 [shape = 'u32[72,128]{1,0:T(1,128)}', space=vmem, size = 0x9000, scoped, tag = 'internal scratch']
  #allocation2 [shape = 'f32[1,32,256]{2,1,0:T(8,128)}', space=vmem, size = 0x8000, scoped, tag = 'scratch operand']
  #allocation3 [shape = 's32[1]{0}', space=sflag, size = 0x4, scoped, tag = 'scratch operand']
  #allocation8 [shape = 's32[]', space=sflag, size = 0x4, offset = 0, fixed_abs, tag = 'sflag constant byte address 0x0 - dummy sync flag']
  #allocation9 [shape = 's32[]', space=sflag, size = 0x4, offset = 0, fixed_abs, tag = 'sflag constant byte address 0x0 - dummy sync flag']
  #allocation10 [shape = 'u32[]', space=smem, size = 0x4, offset = 0x44, fixed_abs, tag = 'smem constant byte address 0x44 - assertion arg 0']
  #allocation11 [shape = 'u32[]', space=smem, size = 0x4, offset = 0x48, fixed_abs, tag = 'smem constant byte address 0x48 - assertion arg 1']
  %s0 = inlined_call_operand.hbm [shape: f32[17,16,32], index: 0, kind: input, shape index: {}]
  %s1 = inlined_call_operand.hbm [shape: f32[2,32,256], index: 1, kind: input, shape index: {}]
  %s2 = inlined_call_operand.hbm [shape: f32[2,16,128], index: 2, kind: output, shape index: {}]
  %s3 = sld [smem:[#allocation0]]
  $region45: #{tpu_custom_call.1} parent=0
    _
  %s5 = ssub.s32 1, %s3
  %s6 = scalar_select 0, %s5, %s3
  $region1: #{tpu_custom_call.1} parent=0
    #allocation4 [shape = 'u8[139264]{0}', space=vmem, size = 0x22000, scoped, tag = 'input window, operand 0, single buffered']
    #allocation5 [shape = 's32[2]{0}', space=sflag, size = 0x8, scoped, tag = 'scoped memory for tpu_custom_call.1']
    #allocation6 [shape = 's32[2]{0}', space=sflag, size = 0x8, scoped, tag = 'scoped memory for tpu_custom_call.1']
    #allocation7 [shape = 'u8[16384]{0}', space=vmem, size = 0x4000, scoped, tag = 'output window, operand 0']
    %7 = vsyncpa [#allocation5], 0
    %8 = vsyncpa [#allocation6], 0
    %s9 = scalar_lea.sflag [#allocation6], 1
    %10 = vsyncpa %s9, 0
    loop: start=0, step=1, limit=4
    $region2: #{tpu_custom_call.1} parent=1 // loop_pre_header
      _
    $region3: #{tpu_custom_call.1} parent=1 // loop_header
      %s12 = sphi 0, %s16
      %p13 = scmp.ge.s32.totalorder %s12, 4
      %s19 = sphi 0, %s31
      %s20 = sphi 0, %s27
      %s21 = sphi 0, %s19
      %s22 = sphi 0, %s20
      %s23 = sphi 0, %s21
      %s24 = sphi 0, %s22
      %s32 = sphi 0, %s32
      %s34 = sphi 0, %s32
      %s35 = sphi 0, %s34
      %s49 = sphi 0, %s35
      %s57 = sphi 0, %s59
      %s60 = sphi 0, %s57
      %s61 = sphi 0, %s60
      %s77 = sphi 0, %s61
    $region4: #{tpu_custom_call.1} parent=1 // loop_header_branch
      %15 = sbr.rel (%p13) target = $region8
    $region5: #{tpu_custom_call.1} parent=1 // loop_body
      %s17 = ssub.s32 %s12, 1
      %s18 = ssub.s32 %s12, 2
      %s25 = sadd.s32 1, %s20
      %p26 = scmp.ge.s32.totalorder %s25, 1
      %s27 = scalar_select %p26, 0, %s25
      %s28 = sadd.s32 1, %s19
      %s29 = scalar_select %p26, %s28, %s19
      %p30 = scmp.ge.s32.totalorder %s29, 2
      %s31 = scalar_select %p30, 0, %s29
      %s33 = sadd.s32 %s32, 1
      %p36 = scmp.eq.s32.totalorder %s12, 1
      %p37 = scmp.ne.s32.totalorder %s32, %s34
      %p38 = scmp.eq.s32.totalorder %s12, 0
      %p39 = por %p37, %p38
      %p40 = scmp.ne.s32.totalorder %s32, %s34
      %p41 = scmp.eq.s32.totalorder %s17, 1
      %p42 = por %p40, %p41
      %p43 = scmp.ne.s32.totalorder %s34, %s35
      %p44 = scmp.eq.s32.totalorder %s17, 0
      %p45 = por %p43, %p44
      %p46 = scmp.ne.s32.totalorder %s34, %s35
      %p47 = scmp.eq.s32.totalorder %s18, 1
      %p48 = por %p46, %p47
      %p50 = scmp.ne.s32.totalorder %s35, %s49
      %p51 = scmp.eq.s32.totalorder %s18, 0
      %p52 = por %p50, %p51
      %s53 = ssub.s32 %s19, %s31
      %s54 = ssub.s32 %s20, %s27
      %s55 = sor.u32 %s53, %s54
      %p56 = scmp.eq.s32.totalorder %s55, 0
      %s58 = sadd.s32 %s57, 1
      %s59 = scalar_select %p56, %s57, %s58
      %p62 = pneg %p56
      %p63 = scmp.eq.s32.totalorder %s12, 1
      %p64 = por %p62, %p63
      %p65 = scmp.ne.s32.totalorder %s57, %s60
      %p66 = scmp.eq.s32.totalorder %s12, 0
      %p67 = por %p65, %p66
      %p68 = scmp.ne.s32.totalorder %s57, %s60
      %p69 = scmp.eq.s32.totalorder %s17, 1
      %p70 = por %p68, %p69
      %p71 = scmp.ne.s32.totalorder %s60, %s61
      %p72 = scmp.eq.s32.totalorder %s17, 0
      %p73 = por %p71, %p72
      %p74 = scmp.ne.s32.totalorder %s60, %s61
      %p75 = scmp.eq.s32.totalorder %s18, 1
      %p76 = por %p74, %p75
      %p78 = scmp.ne.s32.totalorder %s61, %s77
      %p79 = scmp.eq.s32.totalorder %s18, 0
      %p80 = por %p78, %p79
      %p81 = scmp.le.s32.totalorder 1, %s12
      %p82 = scmp.lt.s32.totalorder %s12, 3
      %p83 = pnand %p81, %p82
      %p84 = pneg %p83
      // Predicated region
      $region9: #{tpu_custom_call.1} parent=5 // pred_check
        _
      $region10: #{tpu_custom_call.1} parent=5 // pred_check_branch
        %86 = sbr.rel (%p83) target = $region12
      $region11: #{tpu_custom_call.1} parent=5 // pred_region
        %s87 = ssub.s32 %s12, 1
        // Predicated region
        $region13: #{tpu_custom_call.1} parent=11 // pred_check
          %p88 = pneg %p45
        $region14: #{tpu_custom_call.1} parent=11 // pred_check_branch
          %90 = sbr.rel (%p88) target = $region16
        $region15: #{tpu_custom_call.1} parent=11 // pred_region
          %92 = vsyncadd [#allocation5], 0
          %s93 = sshll.u32 %s0, 4
          %s94 = int_to_ptr.hbm [resolvable:$true] %s93
          %s95 = sshll.u32 [#allocation4], 4
          %s96 = int_to_ptr.vmem [resolvable:$true] %s95
          %101 = dma.hbm_to_vmem [thread:$0]  %s94, 4352, %s96, [#allocation5], 128, 128, 8
        $region16: #{tpu_custom_call.1} parent=11 // pred_fallthru
          _
      $region12: #{tpu_custom_call.1} parent=5 // pred_fallthru
        _
      %p102 = scmp.lt.s32.totalorder %s12, 2
      // Predicated region
      $region17: #{tpu_custom_call.1} parent=5 // pred_check
        %p103 = pneg %p102
      $region18: #{tpu_custom_call.1} parent=5 // pred_check_branch
        %105 = sbr.rel (%p103) target = $region20
      $region19: #{tpu_custom_call.1} parent=5 // pred_region
        _
      $region20: #{tpu_custom_call.1} parent=5 // pred_fallthru
        _
      %p106 = scmp.le.s32.totalorder 1, %s12
      %p107 = scmp.lt.s32.totalorder %s12, 3
      %p108 = pnand %p106, %p107
      %p109 = pneg %p108
      // Predicated region
      $region21: #{tpu_custom_call.1} parent=5 // pred_check
        _
      $region22: #{tpu_custom_call.1} parent=5 // pred_check_branch
        %111 = sbr.rel (%p108) target = $region24
      $region23: #{tpu_custom_call.1} parent=5 // pred_region
        %s112 = ssub.s32 %s12, 1
        // Predicated region
        $region25: #{tpu_custom_call.1} parent=23 // pred_check
          %p113 = pneg %p45
        $region26: #{tpu_custom_call.1} parent=23 // pred_check_branch
          %115 = sbr.rel (%p113) target = $region28
        $region27: #{tpu_custom_call.1} parent=23 // pred_region
          %117 = dma.done [#allocation5], 4352
        $region28: #{tpu_custom_call.1} parent=23 // pred_fallthru
          _
        %p118 = pneg %p45
        %p119 = pneg %p42
        %p120 = pneg %p73
        %p121 = pneg %p70
        %s122 = sand.u32 %s60, 1
        %s123 = scalar_lea.sflag [#allocation6], %s122
        %s124 = sand.u32 %s60, 1
        %s125 = smul.addr %s124, 16
        %s126 = scalar_lea.vmem [#allocation7], %s125
        %s127 = smul.u32 2, %s22
        %s128 = smul.u32 %s22, 16
        %s129 = sshra.s32 %s128, 3
        %s130 = sand.u32 %s128, 7
        %s131 = smul.u32 %s129, 2
        %s132 = smul.u32 %s21, 8
        %s133 = sadd.s32 %s131, %s132
        %s134 = smul.addr %s133, 8
        %s135 = scalar_lea.hbm %s1, %s134
        // Predicated region
        $region29: #{tpu_custom_call.1} parent=23 // pred_check
          _
        $region30: #{tpu_custom_call.1} parent=23 // pred_check_branch
          %137 = sbr.rel target = $region32
        $region31: #{tpu_custom_call.1} parent=23 // pred_region
          %138 = sst [smem:[#allocation10]] [#allocation9]
          %139 = sst [smem:[#allocation11]] [#allocation8]
        $region32: #{tpu_custom_call.1} parent=23 // pred_fallthru
          _
        %141 = shalt.err (0)
        %s143 = sshll.u32 %s135, 4
        %s144 = int_to_ptr.hbm [resolvable:$true] %s143
        %s145 = sshll.u32 [#allocation2], 4
        %s146 = int_to_ptr.vmem [resolvable:$true] %s145
        %148 = dma.hbm_to_vmem [thread:$0]  %s144, 1024, %s146, [#allocation3]
        %s149 = smul.u32 8, 1
        %s150 = smul.u32 %s149, 4
        %s151 = smul.u32 %s150, 2
        %s152 = sshll.u32 %s151, 4
        %153 = dma.done [#allocation3], %s152
        %v154 = vld [vmem:[#allocation2] sm:$0xff]
        %v155 = vld [vmem:[#allocation2 + $0x10] sm:$0xff]
        %v156 = vld [vmem:[#allocation2 + $0x20] sm:$0xff]
        %v157 = vld [vmem:[#allocation2 + $0x30] sm:$0xff]
        %v158 = vld [vmem:[#allocation4] sm:$0xff]
        %v159 = vld [vmem:[#allocation4 + $0x8] sm:$0xff]
        %vm160 = vcmask 261120
        %v162 = vsel %vm160, %v158, 0
        %v165 = vsel %vm160, %v159, 0
        %167 = vmatpush.msra.mxu0 0.0
        %168 = vmatpush.msra.mxu0 0.0
        %169 = vmatpush.msra.mxu0 0.0
        %170 = vmatpush.msra.mxu0 0.0
        %171 = vmatpush.msra.mxu0 0.0
        %172 = vmatpush.msra.mxu0 0.0
        %173 = vmatpush.msra.mxu0 0.0
        %174 = vmatpush.msra.mxu0 0.0
        %175 = vmatpush.msra.mxu0 0.0
        %176 = vmatpush.msra.mxu0 0.0
        %177 = vmatpush.msra.mxu0 0.0
        %178 = vmatpush.msra.mxu0 0.0
        %179 = vmatpush.msra.mxu0 %v157
        %180 = vmatpush.msra.mxu0 %v156
        %181 = vmatpush.msra.mxu0 %v155
        %182 = vmatpush.msra.mxu0 %v154
        %183 = vmatmul.f32.gmra.mxu0 %v162
        %v184 = vpop.f32.mrf.mxu0
        %v185 = vadd.f32 0.0, %v184
        %186 = vmatmul.f32.gmra.mxu0 %v165
        %v187 = vpop.f32.mrf.mxu0
        %v188 = vadd.f32 0.0, %v187
        %189 = vdwg.mxu0
        %190 = vst [vmem:[%s126] sm:$0xff] %v185
        %191 = vst [vmem:[%s126 + $0x8] sm:$0xff] %v188
        %v192 = vld [vmem:[#allocation2] sm:$0xff]
        %v193 = vld [vmem:[#allocation2 + $0x8] sm:$0xff]
        %v194 = vld [vmem:[#allocation2 + $0x10] sm:$0xff]
        %v195 = vld [vmem:[#allocation2 + $0x18] sm:$0xff]
        %v196 = vld [vmem:[#allocation2 + $0x20] sm:$0xff]
        %v197 = vld [vmem:[#allocation2 + $0x28] sm:$0xff]
        %v198 = vld [vmem:[#allocation2 + $0x30] sm:$0xff]
        %v199 = vld [vmem:[#allocation2 + $0x38] sm:$0xff]
        %s200 = scalar_lea.vmem [#allocation4], 16
        %v201 = vld [vmem:[%s200] sm:$0xff]
        %v202 = vld [vmem:[%s200 + $0x8] sm:$0xff]
        %211 = vrot.lane.b32.xlu0 %v192, 127
        %v212 = vpop.permute.xlu0 %211
        %213 = vrot.lane.b32.xlu0 %v193, 127
        %v214 = vpop.permute.xlu0 %213
        %215 = vrot.lane.b32.xlu0 %v194, 127
        %v216 = vpop.permute.xlu0 %215
        %217 = vrot.lane.b32.xlu0 %v195, 127
        %v218 = vpop.permute.xlu0 %217
        %219 = vrot.lane.b32.xlu0 %v196, 127
        %v220 = vpop.permute.xlu0 %219
        %221 = vrot.lane.b32.xlu0 %v197, 127
        %v222 = vpop.permute.xlu0 %221
        %223 = vrot.lane.b32.xlu0 %v198, 127
        %v224 = vpop.permute.xlu0 %223
        %225 = vrot.lane.b32.xlu0 %v199, 127
        %v226 = vpop.permute.xlu0 %225
        %vm227 = vcmask 1039360
        %v228 = vsel %vm227, %v212, %v214
        %v229 = vsel %vm227, %v216, %v218
        %v230 = vsel %vm227, %v220, %v222
        %v231 = vsel %vm227, %v224, %v226
        %v237 = vsel %vm160, %v201, 0
        %v240 = vsel %vm160, %v202, 0
        %242 = vmatpush.msra.mxu0 0.0
        %243 = vmatpush.msra.mxu0 0.0
        %244 = vmatpush.msra.mxu0 0.0
        %245 = vmatpush.msra.mxu0 0.0
        %246 = vmatpush.msra.mxu0 0.0
        %247 = vmatpush.msra.mxu0 0.0
        %248 = vmatpush.msra.mxu0 0.0
        %249 = vmatpush.msra.mxu0 0.0
        %250 = vmatpush.msra.mxu0 0.0
        %251 = vmatpush.msra.mxu0 0.0
        %252 = vmatpush.msra.mxu0 0.0
        %253 = vmatpush.msra.mxu0 0.0
        %254 = vmatpush.msra.mxu0 %v231
        %255 = vmatpush.msra.mxu0 %v230
        %256 = vmatpush.msra.mxu0 %v229
        %257 = vmatpush.msra.mxu0 %v228
        %258 = vmatmul.f32.gmra.mxu0 %v237
        %v259 = vpop.f32.mrf.mxu0
        %v260 = vadd.f32 0.0, %v259
        %261 = vmatmul.f32.gmra.mxu0 %v240
        %v262 = vpop.f32.mrf.mxu0
        %v263 = vadd.f32 0.0, %v262
        %264 = vdwg.mxu0
        %v265 = vld [vmem:[%s126] sm:$0xff]
        %v266 = vld [vmem:[%s126 + $0x8] sm:$0xff]
        %v267 = vadd.f32 %v265, %v260
        %v268 = vadd.f32 %v266, %v263
        %269 = vst [vmem:[%s126] sm:$0xff] %v267
        %270 = vst [vmem:[%s126 + $0x8] sm:$0xff] %v268
        %v271 = vld [vmem:[#allocation2] sm:$0xff]
        %v272 = vld [vmem:[#allocation2 + $0x8] sm:$0xff]
        %v273 = vld [vmem:[#allocation2 + $0x10] sm:$0xff]
        %v274 = vld [vmem:[#allocation2 + $0x18] sm:$0xff]
        %v275 = vld [vmem:[#allocation2 + $0x20] sm:$0xff]
        %v276 = vld [vmem:[#allocation2 + $0x28] sm:$0xff]
        %v277 = vld [vmem:[#allocation2 + $0x30] sm:$0xff]
        %v278 = vld [vmem:[#allocation2 + $0x38] sm:$0xff]
        %s279 = scalar_lea.vmem [#allocation4], 32
        %v280 = vld [vmem:[%s279] sm:$0xff]
        %v281 = vld [vmem:[%s279 + $0x8] sm:$0xff]
        %290 = vrot.lane.b32.xlu0 %v271, 126
        %v291 = vpop.permute.xlu0 %290
        %292 = vrot.lane.b32.xlu0 %v272, 126
        %v293 = vpop.permute.xlu0 %292
        %294 = vrot.lane.b32.xlu0 %v273, 126
        %v295 = vpop.permute.xlu0 %294
        %296 = vrot.lane.b32.xlu0 %v274, 126
        %v297 = vpop.permute.xlu0 %296
        %298 = vrot.lane.b32.xlu0 %v275, 126
        %v299 = vpop.permute.xlu0 %298
        %300 = vrot.lane.b32.xlu0 %v276, 126
        %v301 = vpop.permute.xlu0 %300
        %302 = vrot.lane.b32.xlu0 %v277, 126
        %v303 = vpop.permute.xlu0 %302
        %304 = vrot.lane.b32.xlu0 %v278, 126
        %v305 = vpop.permute.xlu0 %304
        %vm306 = vcmask 1031168
        %v307 = vsel %vm306, %v291, %v293
        %v308 = vsel %vm306, %v295, %v297
        %v309 = vsel %vm306, %v299, %v301
        %v310 = vsel %vm306, %v303, %v305
        %v316 = vsel %vm160, %v280, 0
        %v319 = vsel %vm160, %v281, 0
        %321 = vmatpush.msra.mxu0 0.0
        %322 = vmatpush.msra.mxu0 0.0
        %323 = vmatpush.msra.mxu0 0.0
        %324 = vmatpush.msra.mxu0 0.0
        %325 = vmatpush.msra.mxu0 0.0
        %326 = vmatpush.msra.mxu0 0.0
        %327 = vmatpush.msra.mxu0 0.0
        %328 = vmatpush.msra.mxu0 0.0
        %329 = vmatpush.msra.mxu0 0.0
        %330 = vmatpush.msra.mxu0 0.0
        %331 = vmatpush.msra.mxu0 0.0
        %332 = vmatpush.msra.mxu0 0.0
        %333 = vmatpush.msra.mxu0 %v310
        %334 = vmatpush.msra.mxu0 %v309
        %335 = vmatpush.msra.mxu0 %v308
        %336 = vmatpush.msra.mxu0 %v307
        %337 = vmatmul.f32.gmra.mxu0 %v316
        %v338 = vpop.f32.mrf.mxu0
        %v339 = vadd.f32 0.0, %v338
        %340 = vmatmul.f32.gmra.mxu0 %v319
        %v341 = vpop.f32.mrf.mxu0
        %v342 = vadd.f32 0.0, %v341
        %343 = vdwg.mxu0
        %v344 = vld [vmem:[%s126] sm:$0xff]
        %v345 = vld [vmem:[%s126 + $0x8] sm:$0xff]
        %v346 = vadd.f32 %v344, %v339
        %v347 = vadd.f32 %v345, %v342
        %348 = vst [vmem:[%s126] sm:$0xff] %v346
        %349 = vst [vmem:[%s126 + $0x8] sm:$0xff] %v347
        %v350 = vld [vmem:[#allocation2] sm:$0xff]
        %v351 = vld [vmem:[#allocation2 + $0x8] sm:$0xff]
        %v352 = vld [vmem:[#allocation2 + $0x10] sm:$0xff]
        %v353 = vld [vmem:[#allocation2 + $0x18] sm:$0xff]
        %v354 = vld [vmem:[#allocation2 + $0x20] sm:$0xff]
        %v355 = vld [vmem:[#allocation2 + $0x28] sm:$0xff]
        %v356 = vld [vmem:[#allocation2 + $0x30] sm:$0xff]
        %v357 = vld [vmem:[#allocation2 + $0x38] sm:$0xff]
        %s358 = scalar_lea.vmem [#allocation4], 48
        %v359 = vld [vmem:[%s358] sm:$0xff]
        %v360 = vld [vmem:[%s358 + $0x8] sm:$0xff]
        %369 = vrot.lane.b32.xlu0 %v350, 125
        %v370 = vpop.permute.xlu0 %369
        %371 = vrot.lane.b32.xlu0 %v351, 125
        %v372 = vpop.permute.xlu0 %371
        %373 = vrot.lane.b32.xlu0 %v352, 125
        %v374 = vpop.permute.xlu0 %373
        %375 = vrot.lane.b32.xlu0 %v353, 125
        %v376 = vpop.permute.xlu0 %375
        %377 = vrot.lane.b32.xlu0 %v354, 125
        %v378 = vpop.permute.xlu0 %377
        %379 = vrot.lane.b32.xlu0 %v355, 125
        %v380 = vpop.permute.xlu0 %379
        %381 = vrot.lane.b32.xlu0 %v356, 125
        %v382 = vpop.permute.xlu0 %381
        %383 = vrot.lane.b32.xlu0 %v357, 125
        %v384 = vpop.permute.xlu0 %383
        %vm385 = vcmask 1022976
        %v386 = vsel %vm385, %v370, %v372
        %v387 = vsel %vm385, %v374, %v376
        %v388 = vsel %vm385, %v378, %v380
        %v389 = vsel %vm385, %v382, %v384
        %v395 = vsel %vm160, %v359, 0
        %v398 = vsel %vm160, %v360, 0
        %400 = vmatpush.msra.mxu0 0.0
        %401 = vmatpush.msra.mxu0 0.0
        %402 = vmatpush.msra.mxu0 0.0
        %403 = vmatpush.msra.mxu0 0.0
        %404 = vmatpush.msra.mxu0 0.0
        %405 = vmatpush.msra.mxu0 0.0
        %406 = vmatpush.msra.mxu0 0.0
        %407 = vmatpush.msra.mxu0 0.0
        %408 = vmatpush.msra.mxu0 0.0
        %409 = vmatpush.msra.mxu0 0.0
        %410 = vmatpush.msra.mxu0 0.0
        %411 = vmatpush.msra.mxu0 0.0
        %412 = vmatpush.msra.mxu0 %v389
        %413 = vmatpush.msra.mxu0 %v388
        %414 = vmatpush.msra.mxu0 %v387
        %415 = vmatpush.msra.mxu0 %v386
        %416 = vmatmul.f32.gmra.mxu0 %v395
        %v417 = vpop.f32.mrf.mxu0
        %v418 = vadd.f32 0.0, %v417
        %419 = vmatmul.f32.gmra.mxu0 %v398
        %v420 = vpop.f32.mrf.mxu0
        %v421 = vadd.f32 0.0, %v420
        %422 = vdwg.mxu0
        %v423 = vld [vmem:[%s126] sm:$0xff]
        %v424 = vld [vmem:[%s126 + $0x8] sm:$0xff]
        %v425 = vadd.f32 %v423, %v418
        %v426 = vadd.f32 %v424, %v421
        %427 = vst [vmem:[%s126] sm:$0xff] %v425
        %428 = vst [vmem:[%s126 + $0x8] sm:$0xff] %v426
        %v429 = vld [vmem:[#allocation2] sm:$0xff]
        %v430 = vld [vmem:[#allocation2 + $0x8] sm:$0xff]
        %v431 = vld [vmem:[#allocation2 + $0x10] sm:$0xff]
        %v432 = vld [vmem:[#allocation2 + $0x18] sm:$0xff]
        %v433 = vld [vmem:[#allocation2 + $0x20] sm:$0xff]
        %v434 = vld [vmem:[#allocation2 + $0x28] sm:$0xff]
        %v435 = vld [vmem:[#allocation2 + $0x30] sm:$0xff]
        %v436 = vld [vmem:[#allocation2 + $0x38] sm:$0xff]
        %s437 = scalar_lea.vmem [#allocation4], 64
        %v438 = vld [vmem:[%s437] sm:$0xff]
        %v439 = vld [vmem:[%s437 + $0x8] sm:$0xff]
        %448 = vrot.lane.b32.xlu0 %v429, 124
        %v449 = vpop.permute.xlu0 %448
        %450 = vrot.lane.b32.xlu0 %v430, 124
        %v451 = vpop.permute.xlu0 %450
        %452 = vrot.lane.b32.xlu0 %v431, 124
        %v453 = vpop.permute.xlu0 %452
        %454 = vrot.lane.b32.xlu0 %v432, 124
        %v455 = vpop.permute.xlu0 %454
        %456 = vrot.lane.b32.xlu0 %v433, 124
        %v457 = vpop.permute.xlu0 %456
        %458 = vrot.lane.b32.xlu0 %v434, 124
        %v459 = vpop.permute.xlu0 %458
        %460 = vrot.lane.b32.xlu0 %v435, 124
        %v461 = vpop.permute.xlu0 %460
        %462 = vrot.lane.b32.xlu0 %v436, 124
        %v463 = vpop.permute.xlu0 %462
        %vm464 = vcmask 1014784
        %v465 = vsel %vm464, %v449, %v451
        %v466 = vsel %vm464, %v453, %v455
        %v467 = vsel %vm464, %v457, %v459
        %v468 = vsel %vm464, %v461, %v463
        %v474 = vsel %vm160, %v438, 0
        %v477 = vsel %vm160, %v439, 0
        %479 = vmatpush.msra.mxu0 0.0
        %480 = vmatpush.msra.mxu0 0.0
        %481 = vmatpush.msra.mxu0 0.0
        %482 = vmatpush.msra.mxu0 0.0
        %483 = vmatpush.msra.mxu0 0.0
        %484 = vmatpush.msra.mxu0 0.0
        %485 = vmatpush.msra.mxu0 0.0
        %486 = vmatpush.msra.mxu0 0.0
        %487 = vmatpush.msra.mxu0 0.0
        %488 = vmatpush.msra.mxu0 0.0
        %489 = vmatpush.msra.mxu0 0.0
        %490 = vmatpush.msra.mxu0 0.0
        %491 = vmatpush.msra.mxu0 %v468
        %492 = vmatpush.msra.mxu0 %v467
        %493 = vmatpush.msra.mxu0 %v466
        %494 = vmatpush.msra.mxu0 %v465
        %495 = vmatmul.f32.gmra.mxu0 %v474
        %v496 = vpop.f32.mrf.mxu0
        %v497 = vadd.f32 0.0, %v496
        %498 = vmatmul.f32.gmra.mxu0 %v477
        %v499 = vpop.f32.mrf.mxu0
        %v500 = vadd.f32 0.0, %v499
        %501 = vdwg.mxu0
        %v502 = vld [vmem:[%s126] sm:$0xff]
        %v503 = vld [vmem:[%s126 + $0x8] sm:$0xff]
        %v504 = vadd.f32 %v502, %v497
        %v505 = vadd.f32 %v503, %v500
        %506 = vst [vmem:[%s126] sm:$0xff] %v504
        %507 = vst [vmem:[%s126 + $0x8] sm:$0xff] %v505
        %v508 = vld [vmem:[#allocation2] sm:$0xff]
        %v509 = vld [vmem:[#allocation2 + $0x8] sm:$0xff]
        %v510 = vld [vmem:[#allocation2 + $0x10] sm:$0xff]
        %v511 = vld [vmem:[#allocation2 + $0x18] sm:$0xff]
        %v512 = vld [vmem:[#allocation2 + $0x20] sm:$0xff]
        %v513 = vld [vmem:[#allocation2 + $0x28] sm:$0xff]
        %v514 = vld [vmem:[#allocation2 + $0x30] sm:$0xff]
        %v515 = vld [vmem:[#allocation2 + $0x38] sm:$0xff]
        %s516 = scalar_lea.vmem [#allocation4], 80
        %v517 = vld [vmem:[%s516] sm:$0xff]
        %v518 = vld [vmem:[%s516 + $0x8] sm:$0xff]
        %527 = vrot.lane.b32.xlu0 %v508, 123
        %v528 = vpop.permute.xlu0 %527
        %529 = vrot.lane.b32.xlu0 %v509, 123
        %v530 = vpop.permute.xlu0 %529
        %531 = vrot.lane.b32.xlu0 %v510, 123
        %v532 = vpop.permute.xlu0 %531
        %533 = vrot.lane.b32.xlu0 %v511, 123
        %v534 = vpop.permute.xlu0 %533
        %535 = vrot.lane.b32.xlu0 %v512, 123
        %v536 = vpop.permute.xlu0 %535
        %537 = vrot.lane.b32.xlu0 %v513, 123
        %v538 = vpop.permute.xlu0 %537
        %539 = vrot.lane.b32.xlu0 %v514, 123
        %v540 = vpop.permute.xlu0 %539
        %541 = vrot.lane.b32.xlu0 %v515, 123
        %v542 = vpop.permute.xlu0 %541
        %vm543 = vcmask 1006592
        %v544 = vsel %vm543, %v528, %v530
        %v545 = vsel %vm543, %v532, %v534
        %v546 = vsel %vm543, %v536, %v538
        %v547 = vsel %vm543, %v540, %v542
        %v553 = vsel %vm160, %v517, 0
        %v556 = vsel %vm160, %v518, 0
        %558 = vmatpush.msra.mxu0 0.0
        %559 = vmatpush.msra.mxu0 0.0
        %560 = vmatpush.msra.mxu0 0.0
        %561 = vmatpush.msra.mxu0 0.0
        %562 = vmatpush.msra.mxu0 0.0
        %563 = vmatpush.msra.mxu0 0.0
        %564 = vmatpush.msra.mxu0 0.0
        %565 = vmatpush.msra.mxu0 0.0
        %566 = vmatpush.msra.mxu0 0.0
        %567 = vmatpush.msra.mxu0 0.0
        %568 = vmatpush.msra.mxu0 0.0
        %569 = vmatpush.msra.mxu0 0.0
        %570 = vmatpush.msra.mxu0 %v547
        %571 = vmatpush.msra.mxu0 %v546
        %572 = vmatpush.msra.mxu0 %v545
        %573 = vmatpush.msra.mxu0 %v544
        %574 = vmatmul.f32.gmra.mxu0 %v553
        %v575 = vpop.f32.mrf.mxu0
        %v576 = vadd.f32 0.0, %v575
        %577 = vmatmul.f32.gmra.mxu0 %v556
        %v578 = vpop.f32.mrf.mxu0
        %v579 = vadd.f32 0.0, %v578
        %580 = vdwg.mxu0
        %v581 = vld [vmem:[%s126] sm:$0xff]
        %v582 = vld [vmem:[%s126 + $0x8] sm:$0xff]
        %v583 = vadd.f32 %v581, %v576
        %v584 = vadd.f32 %v582, %v579
        %585 = vst [vmem:[%s126] sm:$0xff] %v583
        %586 = vst [vmem:[%s126 + $0x8] sm:$0xff] %v584
        %v587 = vld [vmem:[#allocation2] sm:$0xff]
        %v588 = vld [vmem:[#allocation2 + $0x8] sm:$0xff]
        %v589 = vld [vmem:[#allocation2 + $0x10] sm:$0xff]
        %v590 = vld [vmem:[#allocation2 + $0x18] sm:$0xff]
        %v591 = vld [vmem:[#allocation2 + $0x20] sm:$0xff]
        %v592 = vld [vmem:[#allocation2 + $0x28] sm:$0xff]
        %v593 = vld [vmem:[#allocation2 + $0x30] sm:$0xff]
        %v594 = vld [vmem:[#allocation2 + $0x38] sm:$0xff]
        %s595 = scalar_lea.vmem [#allocation4], 96
        %v596 = vld [vmem:[%s595] sm:$0xff]
        %v597 = vld [vmem:[%s595 + $0x8] sm:$0xff]
        %606 = vrot.lane.b32.xlu0 %v587, 122
        %v607 = vpop.permute.xlu0 %606
        %608 = vrot.lane.b32.xlu0 %v588, 122
        %v609 = vpop.permute.xlu0 %608
        %610 = vrot.lane.b32.xlu0 %v589, 122
        %v611 = vpop.permute.xlu0 %610
        %612 = vrot.lane.b32.xlu0 %v590, 122
        %v613 = vpop.permute.xlu0 %612
        %614 = vrot.lane.b32.xlu0 %v591, 122
        %v615 = vpop.permute.xlu0 %614
        %616 = vrot.lane.b32.xlu0 %v592, 122
        %v617 = vpop.permute.xlu0 %616
        %618 = vrot.lane.b32.xlu0 %v593, 122
        %v619 = vpop.permute.xlu0 %618
        %620 = vrot.lane.b32.xlu0 %v594, 122
        %v621 = vpop.permute.xlu0 %620
        %vm622 = vcmask 998400
        %v623 = vsel %vm622, %v607, %v609
        %v624 = vsel %vm622, %v611, %v613
        %v625 = vsel %vm622, %v615, %v617
        %v626 = vsel %vm622, %v619, %v621
        %v632 = vsel %vm160, %v596, 0
        %v635 = vsel %vm160, %v597, 0
        %637 = vmatpush.msra.mxu0 0.0
        %638 = vmatpush.msra.mxu0 0.0
        %639 = vmatpush.msra.mxu0 0.0
        %640 = vmatpush.msra.mxu0 0.0
        %641 = vmatpush.msra.mxu0 0.0
        %642 = vmatpush.msra.mxu0 0.0
        %643 = vmatpush.msra.mxu0 0.0
        %644 = vmatpush.msra.mxu0 0.0
        %645 = vmatpush.msra.mxu0 0.0
        %646 = vmatpush.msra.mxu0 0.0
        %647 = vmatpush.msra.mxu0 0.0
        %648 = vmatpush.msra.mxu0 0.0
        %649 = vmatpush.msra.mxu0 %v626
        %650 = vmatpush.msra.mxu0 %v625
        %651 = vmatpush.msra.mxu0 %v624
        %652 = vmatpush.msra.mxu0 %v623
        %653 = vmatmul.f32.gmra.mxu0 %v632
        %v654 = vpop.f32.mrf.mxu0
        %v655 = vadd.f32 0.0, %v654
        %656 = vmatmul.f32.gmra.mxu0 %v635
        %v657 = vpop.f32.mrf.mxu0
        %v658 = vadd.f32 0.0, %v657
        %659 = vdwg.mxu0
        %v660 = vld [vmem:[%s126] sm:$0xff]
        %v661 = vld [vmem:[%s126 + $0x8] sm:$0xff]
        %v662 = vadd.f32 %v660, %v655
        %v663 = vadd.f32 %v661, %v658
        %664 = vst [vmem:[%s126] sm:$0xff] %v662
        %665 = vst [vmem:[%s126 + $0x8] sm:$0xff] %v663
        %v666 = vld [vmem:[#allocation2] sm:$0xff]
        %v667 = vld [vmem:[#allocation2 + $0x8] sm:$0xff]
        %v668 = vld [vmem:[#allocation2 + $0x10] sm:$0xff]
        %v669 = vld [vmem:[#allocation2 + $0x18] sm:$0xff]
        %v670 = vld [vmem:[#allocation2 + $0x20] sm:$0xff]
        %v671 = vld [vmem:[#allocation2 + $0x28] sm:$0xff]
        %v672 = vld [vmem:[#allocation2 + $0x30] sm:$0xff]
        %v673 = vld [vmem:[#allocation2 + $0x38] sm:$0xff]
        %s674 = scalar_lea.vmem [#allocation4], 112
        %v675 = vld [vmem:[%s674] sm:$0xff]
        %v676 = vld [vmem:[%s674 + $0x8] sm:$0xff]
        %685 = vrot.lane.b32.xlu0 %v666, 121
        %v686 = vpop.permute.xlu0 %685
        %687 = vrot.lane.b32.xlu0 %v667, 121
        %v688 = vpop.permute.xlu0 %687
        %689 = vrot.lane.b32.xlu0 %v668, 121
        %v690 = vpop.permute.xlu0 %689
        %691 = vrot.lane.b32.xlu0 %v669, 121
        %v692 = vpop.permute.xlu0 %691
        %693 = vrot.lane.b32.xlu0 %v670, 121
        %v694 = vpop.permute.xlu0 %693
        %695 = vrot.lane.b32.xlu0 %v671, 121
        %v696 = vpop.permute.xlu0 %695
        %697 = vrot.lane.b32.xlu0 %v672, 121
        %v698 = vpop.permute.xlu0 %697
        %699 = vrot.lane.b32.xlu0 %v673, 121
        %v700 = vpop.permute.xlu0 %699
        %vm701 = vcmask 990208
        %v702 = vsel %vm701, %v686, %v688
        %v703 = vsel %vm701, %v690, %v692
        %v704 = vsel %vm701, %v694, %v696
        %v705 = vsel %vm701, %v698, %v700
        %v711 = vsel %vm160, %v675, 0
        %v714 = vsel %vm160, %v676, 0
        %716 = vmatpush.msra.mxu0 0.0
        %717 = vmatpush.msra.mxu0 0.0
        %718 = vmatpush.msra.mxu0 0.0
        %719 = vmatpush.msra.mxu0 0.0
        %720 = vmatpush.msra.mxu0 0.0
        %721 = vmatpush.msra.mxu0 0.0
        %722 = vmatpush.msra.mxu0 0.0
        %723 = vmatpush.msra.mxu0 0.0
        %724 = vmatpush.msra.mxu0 0.0
        %725 = vmatpush.msra.mxu0 0.0
        %726 = vmatpush.msra.mxu0 0.0
        %727 = vmatpush.msra.mxu0 0.0
        %728 = vmatpush.msra.mxu0 %v705
        %729 = vmatpush.msra.mxu0 %v704
        %730 = vmatpush.msra.mxu0 %v703
        %731 = vmatpush.msra.mxu0 %v702
        %732 = vmatmul.f32.gmra.mxu0 %v711
        %v733 = vpop.f32.mrf.mxu0
        %v734 = vadd.f32 0.0, %v733
        %735 = vmatmul.f32.gmra.mxu0 %v714
        %v736 = vpop.f32.mrf.mxu0
        %v737 = vadd.f32 0.0, %v736
        %738 = vdwg.mxu0
        %v739 = vld [vmem:[%s126] sm:$0xff]
        %v740 = vld [vmem:[%s126 + $0x8] sm:$0xff]
        %v741 = vadd.f32 %v739, %v734
        %v742 = vadd.f32 %v740, %v737
        %743 = vst [vmem:[%s126] sm:$0xff] %v741
        %744 = vst [vmem:[%s126 + $0x8] sm:$0xff] %v742
        %v745 = vld [vmem:[#allocation2] sm:$0xff]
        %v746 = vld [vmem:[#allocation2 + $0x8] sm:$0xff]
        %v747 = vld [vmem:[#allocation2 + $0x10] sm:$0xff]
        %v748 = vld [vmem:[#allocation2 + $0x18] sm:$0xff]
        %v749 = vld [vmem:[#allocation2 + $0x20] sm:$0xff]
        %v750 = vld [vmem:[#allocation2 + $0x28] sm:$0xff]
        %v751 = vld [vmem:[#allocation2 + $0x30] sm:$0xff]
        %v752 = vld [vmem:[#allocation2 + $0x38] sm:$0xff]
        %s753 = scalar_lea.vmem [#allocation4], 128
        %v754 = vld [vmem:[%s753] sm:$0xff]
        %v755 = vld [vmem:[%s753 + $0x8] sm:$0xff]
        %764 = vrot.lane.b32.xlu0 %v745, 120
        %v765 = vpop.permute.xlu0 %764
        %766 = vrot.lane.b32.xlu0 %v746, 120
        %v767 = vpop.permute.xlu0 %766
        %768 = vrot.lane.b32.xlu0 %v747, 120
        %v769 = vpop.permute.xlu0 %768
        %770 = vrot.lane.b32.xlu0 %v748, 120
        %v771 = vpop.permute.xlu0 %770
        %772 = vrot.lane.b32.xlu0 %v749, 120
        %v773 = vpop.permute.xlu0 %772
        %774 = vrot.lane.b32.xlu0 %v750, 120
        %v775 = vpop.permute.xlu0 %774
        %776 = vrot.lane.b32.xlu0 %v751, 120
        %v777 = vpop.permute.xlu0 %776
        %778 = vrot.lane.b32.xlu0 %v752, 120
        %v779 = vpop.permute.xlu0 %778
        %vm780 = vcmask 982016
        %v781 = vsel %vm780, %v765, %v767
        %v782 = vsel %vm780, %v769, %v771
        %v783 = vsel %vm780, %v773, %v775
        %v784 = vsel %vm780, %v777, %v779
        %v790 = vsel %vm160, %v754, 0
        %v793 = vsel %vm160, %v755, 0
        %795 = vmatpush.msra.mxu0 0.0
        %796 = vmatpush.msra.mxu0 0.0
        %797 = vmatpush.msra.mxu0 0.0
        %798 = vmatpush.msra.mxu0 0.0
        %799 = vmatpush.msra.mxu0 0.0
        %800 = vmatpush.msra.mxu0 0.0
        %801 = vmatpush.msra.mxu0 0.0
        %802 = vmatpush.msra.mxu0 0.0
        %803 = vmatpush.msra.mxu0 0.0
        %804 = vmatpush.msra.mxu0 0.0
        %805 = vmatpush.msra.mxu0 0.0
        %806 = vmatpush.msra.mxu0 0.0
        %807 = vmatpush.msra.mxu0 %v784
        %808 = vmatpush.msra.mxu0 %v783
        %809 = vmatpush.msra.mxu0 %v782
        %810 = vmatpush.msra.mxu0 %v781
        %811 = vmatmul.f32.gmra.mxu0 %v790
        %v812 = vpop.f32.mrf.mxu0
        %v813 = vadd.f32 0.0, %v812
        %814 = vmatmul.f32.gmra.mxu0 %v793
        %v815 = vpop.f32.mrf.mxu0
        %v816 = vadd.f32 0.0, %v815
        %817 = vdwg.mxu0
        %v818 = vld [vmem:[%s126] sm:$0xff]
        %v819 = vld [vmem:[%s126 + $0x8] sm:$0xff]
        %v820 = vadd.f32 %v818, %v813
        %v821 = vadd.f32 %v819, %v816
        %822 = vst [vmem:[%s126] sm:$0xff] %v820
        %823 = vst [vmem:[%s126 + $0x8] sm:$0xff] %v821
        %v824 = vld [vmem:[#allocation2] sm:$0xff]
        %v825 = vld [vmem:[#allocation2 + $0x8] sm:$0xff]
        %v826 = vld [vmem:[#allocation2 + $0x10] sm:$0xff]
        %v827 = vld [vmem:[#allocation2 + $0x18] sm:$0xff]
        %v828 = vld [vmem:[#allocation2 + $0x20] sm:$0xff]
        %v829 = vld [vmem:[#allocation2 + $0x28] sm:$0xff]
        %v830 = vld [vmem:[#allocation2 + $0x30] sm:$0xff]
        %v831 = vld [vmem:[#allocation2 + $0x38] sm:$0xff]
        %s832 = scalar_lea.vmem [#allocation4], 144
        %v833 = vld [vmem:[%s832] sm:$0xff]
        %v834 = vld [vmem:[%s832 + $0x8] sm:$0xff]
        %843 = vrot.lane.b32.xlu0 %v824, 119
        %v844 = vpop.permute.xlu0 %843
        %845 = vrot.lane.b32.xlu0 %v825, 119
        %v846 = vpop.permute.xlu0 %845
        %847 = vrot.lane.b32.xlu0 %v826, 119
        %v848 = vpop.permute.xlu0 %847
        %849 = vrot.lane.b32.xlu0 %v827, 119
        %v850 = vpop.permute.xlu0 %849
        %851 = vrot.lane.b32.xlu0 %v828, 119
        %v852 = vpop.permute.xlu0 %851
        %853 = vrot.lane.b32.xlu0 %v829, 119
        %v854 = vpop.permute.xlu0 %853
        %855 = vrot.lane.b32.xlu0 %v830, 119
        %v856 = vpop.permute.xlu0 %855
        %857 = vrot.lane.b32.xlu0 %v831, 119
        %v858 = vpop.permute.xlu0 %857
        %vm859 = vcmask 973824
        %v860 = vsel %vm859, %v844, %v846
        %v861 = vsel %vm859, %v848, %v850
        %v862 = vsel %vm859, %v852, %v854
        %v863 = vsel %vm859, %v856, %v858
        %v869 = vsel %vm160, %v833, 0
        %v872 = vsel %vm160, %v834, 0
        %874 = vmatpush.msra.mxu0 0.0
        %875 = vmatpush.msra.mxu0 0.0
        %876 = vmatpush.msra.mxu0 0.0
        %877 = vmatpush.msra.mxu0 0.0
        %878 = vmatpush.msra.mxu0 0.0
        %879 = vmatpush.msra.mxu0 0.0
        %880 = vmatpush.msra.mxu0 0.0
        %881 = vmatpush.msra.mxu0 0.0
        %882 = vmatpush.msra.mxu0 0.0
        %883 = vmatpush.msra.mxu0 0.0
        %884 = vmatpush.msra.mxu0 0.0
        %885 = vmatpush.msra.mxu0 0.0
        %886 = vmatpush.msra.mxu0 %v863
        %887 = vmatpush.msra.mxu0 %v862
        %888 = vmatpush.msra.mxu0 %v861
        %889 = vmatpush.msra.mxu0 %v860
        %890 = vmatmul.f32.gmra.mxu0 %v869
        %v891 = vpop.f32.mrf.mxu0
        %v892 = vadd.f32 0.0, %v891
        %893 = vmatmul.f32.gmra.mxu0 %v872
        %v894 = vpop.f32.mrf.mxu0
        %v895 = vadd.f32 0.0, %v894
        %896 = vdwg.mxu0
        %v897 = vld [vmem:[%s126] sm:$0xff]
        %v898 = vld [vmem:[%s126 + $0x8] sm:$0xff]
        %v899 = vadd.f32 %v897, %v892
        %v900 = vadd.f32 %v898, %v895
        %901 = vst [vmem:[%s126] sm:$0xff] %v899
        %902 = vst [vmem:[%s126 + $0x8] sm:$0xff] %v900
        %v903 = vld [vmem:[#allocation2] sm:$0xff]
        %v904 = vld [vmem:[#allocation2 + $0x8] sm:$0xff]
        %v905 = vld [vmem:[#allocation2 + $0x10] sm:$0xff]
        %v906 = vld [vmem:[#allocation2 + $0x18] sm:$0xff]
        %v907 = vld [vmem:[#allocation2 + $0x20] sm:$0xff]
        %v908 = vld [vmem:[#allocation2 + $0x28] sm:$0xff]
        %v909 = vld [vmem:[#allocation2 + $0x30] sm:$0xff]
        %v910 = vld [vmem:[#allocation2 + $0x38] sm:$0xff]
        %s911 = scalar_lea.vmem [#allocation4], 160
        %v912 = vld [vmem:[%s911] sm:$0xff]
        %v913 = vld [vmem:[%s911 + $0x8] sm:$0xff]
        %922 = vrot.lane.b32.xlu0 %v903, 118
        %v923 = vpop.permute.xlu0 %922
        %924 = vrot.lane.b32.xlu0 %v904, 118
        %v925 = vpop.permute.xlu0 %924
        %926 = vrot.lane.b32.xlu0 %v905, 118
        %v927 = vpop.permute.xlu0 %926
        %928 = vrot.lane.b32.xlu0 %v906, 118
        %v929 = vpop.permute.xlu0 %928
        %930 = vrot.lane.b32.xlu0 %v907, 118
        %v931 = vpop.permute.xlu0 %930
        %932 = vrot.lane.b32.xlu0 %v908, 118
        %v933 = vpop.permute.xlu0 %932
        %934 = vrot.lane.b32.xlu0 %v909, 118
        %v935 = vpop.permute.xlu0 %934
        %936 = vrot.lane.b32.xlu0 %v910, 118
        %v937 = vpop.permute.xlu0 %936
        %vm938 = vcmask 965632
        %v939 = vsel %vm938, %v923, %v925
        %v940 = vsel %vm938, %v927, %v929
        %v941 = vsel %vm938, %v931, %v933
        %v942 = vsel %vm938, %v935, %v937
        %v948 = vsel %vm160, %v912, 0
        %v951 = vsel %vm160, %v913, 0
        %953 = vmatpush.msra.mxu0 0.0
        %954 = vmatpush.msra.mxu0 0.0
        %955 = vmatpush.msra.mxu0 0.0
        %956 = vmatpush.msra.mxu0 0.0
        %957 = vmatpush.msra.mxu0 0.0
        %958 = vmatpush.msra.mxu0 0.0
        %959 = vmatpush.msra.mxu0 0.0
        %960 = vmatpush.msra.mxu0 0.0
        %961 = vmatpush.msra.mxu0 0.0
        %962 = vmatpush.msra.mxu0 0.0
        %963 = vmatpush.msra.mxu0 0.0
        %964 = vmatpush.msra.mxu0 0.0
        %965 = vmatpush.msra.mxu0 %v942
        %966 = vmatpush.msra.mxu0 %v941
        %967 = vmatpush.msra.mxu0 %v940
        %968 = vmatpush.msra.mxu0 %v939
        %969 = vmatmul.f32.gmra.mxu0 %v948
        %v970 = vpop.f32.mrf.mxu0
        %v971 = vadd.f32 0.0, %v970
        %972 = vmatmul.f32.gmra.mxu0 %v951
        %v973 = vpop.f32.mrf.mxu0
        %v974 = vadd.f32 0.0, %v973
        %975 = vdwg.mxu0
        %v976 = vld [vmem:[%s126] sm:$0xff]
        %v977 = vld [vmem:[%s126 + $0x8] sm:$0xff]
        %v978 = vadd.f32 %v976, %v971
        %v979 = vadd.f32 %v977, %v974
        %980 = vst [vmem:[%s126] sm:$0xff] %v978
        %981 = vst [vmem:[%s126 + $0x8] sm:$0xff] %v979
        %v982 = vld [vmem:[#allocation2] sm:$0xff]
        %v983 = vld [vmem:[#allocation2 + $0x8] sm:$0xff]
        %v984 = vld [vmem:[#allocation2 + $0x10] sm:$0xff]
        %v985 = vld [vmem:[#allocation2 + $0x18] sm:$0xff]
        %v986 = vld [vmem:[#allocation2 + $0x20] sm:$0xff]
        %v987 = vld [vmem:[#allocation2 + $0x28] sm:$0xff]
        %v988 = vld [vmem:[#allocation2 + $0x30] sm:$0xff]
        %v989 = vld [vmem:[#allocation2 + $0x38] sm:$0xff]
        %s990 = scalar_lea.vmem [#allocation4], 176
        %v991 = vld [vmem:[%s990] sm:$0xff]
        %v992 = vld [vmem:[%s990 + $0x8] sm:$0xff]
        %1001 = vrot.lane.b32.xlu0 %v982, 117
        %v1002 = vpop.permute.xlu0 %1001
        %1003 = vrot.lane.b32.xlu0 %v983, 117
        %v1004 = vpop.permute.xlu0 %1003
        %1005 = vrot.lane.b32.xlu0 %v984, 117
        %v1006 = vpop.permute.xlu0 %1005
        %1007 = vrot.lane.b32.xlu0 %v985, 117
        %v1008 = vpop.permute.xlu0 %1007
        %1009 = vrot.lane.b32.xlu0 %v986, 117
        %v1010 = vpop.permute.xlu0 %1009
        %1011 = vrot.lane.b32.xlu0 %v987, 117
        %v1012 = vpop.permute.xlu0 %1011
        %1013 = vrot.lane.b32.xlu0 %v988, 117
        %v1014 = vpop.permute.xlu0 %1013
        %1015 = vrot.lane.b32.xlu0 %v989, 117
        %v1016 = vpop.permute.xlu0 %1015
        %vm1017 = vcmask 957440
        %v1018 = vsel %vm1017, %v1002, %v1004
        %v1019 = vsel %vm1017, %v1006, %v1008
        %v1020 = vsel %vm1017, %v1010, %v1012
        %v1021 = vsel %vm1017, %v1014, %v1016
        %v1027 = vsel %vm160, %v991, 0
        %v1030 = vsel %vm160, %v992, 0
        %1032 = vmatpush.msra.mxu0 0.0
        %1033 = vmatpush.msra.mxu0 0.0
        %1034 = vmatpush.msra.mxu0 0.0
        %1035 = vmatpush.msra.mxu0 0.0
        %1036 = vmatpush.msra.mxu0 0.0
        %1037 = vmatpush.msra.mxu0 0.0
        %1038 = vmatpush.msra.mxu0 0.0
        %1039 = vmatpush.msra.mxu0 0.0
        %1040 = vmatpush.msra.mxu0 0.0
        %1041 = vmatpush.msra.mxu0 0.0
        %1042 = vmatpush.msra.mxu0 0.0
        %1043 = vmatpush.msra.mxu0 0.0
        %1044 = vmatpush.msra.mxu0 %v1021
        %1045 = vmatpush.msra.mxu0 %v1020
        %1046 = vmatpush.msra.mxu0 %v1019
        %1047 = vmatpush.msra.mxu0 %v1018
        %1048 = vmatmul.f32.gmra.mxu0 %v1027
        %v1049 = vpop.f32.mrf.mxu0
        %v1050 = vadd.f32 0.0, %v1049
        %1051 = vmatmul.f32.gmra.mxu0 %v1030
        %v1052 = vpop.f32.mrf.mxu0
        %v1053 = vadd.f32 0.0, %v1052
        %1054 = vdwg.mxu0
        %v1055 = vld [vmem:[%s126] sm:$0xff]
        %v1056 = vld [vmem:[%s126 + $0x8] sm:$0xff]
        %v1057 = vadd.f32 %v1055, %v1050
        %v1058 = vadd.f32 %v1056, %v1053
        %1059 = vst [vmem:[%s126] sm:$0xff] %v1057
        %1060 = vst [vmem:[%s126 + $0x8] sm:$0xff] %v1058
        %v1061 = vld [vmem:[#allocation2] sm:$0xff]
        %v1062 = vld [vmem:[#allocation2 + $0x8] sm:$0xff]
        %v1063 = vld [vmem:[#allocation2 + $0x10] sm:$0xff]
        %v1064 = vld [vmem:[#allocation2 + $0x18] sm:$0xff]
        %v1065 = vld [vmem:[#allocation2 + $0x20] sm:$0xff]
        %v1066 = vld [vmem:[#allocation2 + $0x28] sm:$0xff]
        %v1067 = vld [vmem:[#allocation2 + $0x30] sm:$0xff]
        %v1068 = vld [vmem:[#allocation2 + $0x38] sm:$0xff]
        %s1069 = scalar_lea.vmem [#allocation4], 192
        %v1070 = vld [vmem:[%s1069] sm:$0xff]
        %v1071 = vld [vmem:[%s1069 + $0x8] sm:$0xff]
        %1080 = vrot.lane.b32.xlu0 %v1061, 116
        %v1081 = vpop.permute.xlu0 %1080
        %1082 = vrot.lane.b32.xlu0 %v1062, 116
        %v1083 = vpop.permute.xlu0 %1082
        %1084 = vrot.lane.b32.xlu0 %v1063, 116
        %v1085 = vpop.permute.xlu0 %1084
        %1086 = vrot.lane.b32.xlu0 %v1064, 116
        %v1087 = vpop.permute.xlu0 %1086
        %1088 = vrot.lane.b32.xlu0 %v1065, 116
        %v1089 = vpop.permute.xlu0 %1088
        %1090 = vrot.lane.b32.xlu0 %v1066, 116
        %v1091 = vpop.permute.xlu0 %1090
        %1092 = vrot.lane.b32.xlu0 %v1067, 116
        %v1093 = vpop.permute.xlu0 %1092
        %1094 = vrot.lane.b32.xlu0 %v1068, 116
        %v1095 = vpop.permute.xlu0 %1094
        %vm1096 = vcmask 949248
        %v1097 = vsel %vm1096, %v1081, %v1083
        %v1098 = vsel %vm1096, %v1085, %v1087
        %v1099 = vsel %vm1096, %v1089, %v1091
        %v1100 = vsel %vm1096, %v1093, %v1095
        %v1106 = vsel %vm160, %v1070, 0
        %v1109 = vsel %vm160, %v1071, 0
        %1111 = vmatpush.msra.mxu0 0.0
        %1112 = vmatpush.msra.mxu0 0.0
        %1113 = vmatpush.msra.mxu0 0.0
        %1114 = vmatpush.msra.mxu0 0.0
        %1115 = vmatpush.msra.mxu0 0.0
        %1116 = vmatpush.msra.mxu0 0.0
        %1117 = vmatpush.msra.mxu0 0.0
        %1118 = vmatpush.msra.mxu0 0.0
        %1119 = vmatpush.msra.mxu0 0.0
        %1120 = vmatpush.msra.mxu0 0.0
        %1121 = vmatpush.msra.mxu0 0.0
        %1122 = vmatpush.msra.mxu0 0.0
        %1123 = vmatpush.msra.mxu0 %v1100
        %1124 = vmatpush.msra.mxu0 %v1099
        %1125 = vmatpush.msra.mxu0 %v1098
        %1126 = vmatpush.msra.mxu0 %v1097
        %1127 = vmatmul.f32.gmra.mxu0 %v1106
        %v1128 = vpop.f32.mrf.mxu0
        %v1129 = vadd.f32 0.0, %v1128
        %1130 = vmatmul.f32.gmra.mxu0 %v1109
        %v1131 = vpop.f32.mrf.mxu0
        %v1132 = vadd.f32 0.0, %v1131
        %1133 = vdwg.mxu0
        %v1134 = vld [vmem:[%s126] sm:$0xff]
        %v1135 = vld [vmem:[%s126 + $0x8] sm:$0xff]
        %v1136 = vadd.f32 %v1134, %v1129
        %v1137 = vadd.f32 %v1135, %v1132
        %1138 = vst [vmem:[%s126] sm:$0xff] %v1136
        %1139 = vst [vmem:[%s126 + $0x8] sm:$0xff] %v1137
        %v1140 = vld [vmem:[#allocation2] sm:$0xff]
        %v1141 = vld [vmem:[#allocation2 + $0x8] sm:$0xff]
        %v1142 = vld [vmem:[#allocation2 + $0x10] sm:$0xff]
        %v1143 = vld [vmem:[#allocation2 + $0x18] sm:$0xff]
        %v1144 = vld [vmem:[#allocation2 + $0x20] sm:$0xff]
        %v1145 = vld [vmem:[#allocation2 + $0x28] sm:$0xff]
        %v1146 = vld [vmem:[#allocation2 + $0x30] sm:$0xff]
        %v1147 = vld [vmem:[#allocation2 + $0x38] sm:$0xff]
        %s1148 = scalar_lea.vmem [#allocation4], 208
        %v1149 = vld [vmem:[%s1148] sm:$0xff]
        %v1150 = vld [vmem:[%s1148 + $0x8] sm:$0xff]
        %1159 = vrot.lane.b32.xlu0 %v1140, 115
        %v1160 = vpop.permute.xlu0 %1159
        %1161 = vrot.lane.b32.xlu0 %v1141, 115
        %v1162 = vpop.permute.xlu0 %1161
        %1163 = vrot.lane.b32.xlu0 %v1142, 115
        %v1164 = vpop.permute.xlu0 %1163
        %1165 = vrot.lane.b32.xlu0 %v1143, 115
        %v1166 = vpop.permute.xlu0 %1165
        %1167 = vrot.lane.b32.xlu0 %v1144, 115
        %v1168 = vpop.permute.xlu0 %1167
        %1169 = vrot.lane.b32.xlu0 %v1145, 115
        %v1170 = vpop.permute.xlu0 %1169
        %1171 = vrot.lane.b32.xlu0 %v1146, 115
        %v1172 = vpop.permute.xlu0 %1171
        %1173 = vrot.lane.b32.xlu0 %v1147, 115
        %v1174 = vpop.permute.xlu0 %1173
        %vm1175 = vcmask 941056
        %v1176 = vsel %vm1175, %v1160, %v1162
        %v1177 = vsel %vm1175, %v1164, %v1166
        %v1178 = vsel %vm1175, %v1168, %v1170
        %v1179 = vsel %vm1175, %v1172, %v1174
        %v1185 = vsel %vm160, %v1149, 0
        %v1188 = vsel %vm160, %v1150, 0
        %1190 = vmatpush.msra.mxu0 0.0
        %1191 = vmatpush.msra.mxu0 0.0
        %1192 = vmatpush.msra.mxu0 0.0
        %1193 = vmatpush.msra.mxu0 0.0
        %1194 = vmatpush.msra.mxu0 0.0
        %1195 = vmatpush.msra.mxu0 0.0
        %1196 = vmatpush.msra.mxu0 0.0
        %1197 = vmatpush.msra.mxu0 0.0
        %1198 = vmatpush.msra.mxu0 0.0
        %1199 = vmatpush.msra.mxu0 0.0
        %1200 = vmatpush.msra.mxu0 0.0
        %1201 = vmatpush.msra.mxu0 0.0
        %1202 = vmatpush.msra.mxu0 %v1179
        %1203 = vmatpush.msra.mxu0 %v1178
        %1204 = vmatpush.msra.mxu0 %v1177
        %1205 = vmatpush.msra.mxu0 %v1176
        %1206 = vmatmul.f32.gmra.mxu0 %v1185
        %v1207 = vpop.f32.mrf.mxu0
        %v1208 = vadd.f32 0.0, %v1207
        %1209 = vmatmul.f32.gmra.mxu0 %v1188
        %v1210 = vpop.f32.mrf.mxu0
        %v1211 = vadd.f32 0.0, %v1210
        %1212 = vdwg.mxu0
        %v1213 = vld [vmem:[%s126] sm:$0xff]
        %v1214 = vld [vmem:[%s126 + $0x8] sm:$0xff]
        %v1215 = vadd.f32 %v1213, %v1208
        %v1216 = vadd.f32 %v1214, %v1211
        %1217 = vst [vmem:[%s126] sm:$0xff] %v1215
        %1218 = vst [vmem:[%s126 + $0x8] sm:$0xff] %v1216
        %v1219 = vld [vmem:[#allocation2] sm:$0xff]
        %v1220 = vld [vmem:[#allocation2 + $0x8] sm:$0xff]
        %v1221 = vld [vmem:[#allocation2 + $0x10] sm:$0xff]
        %v1222 = vld [vmem:[#allocation2 + $0x18] sm:$0xff]
        %v1223 = vld [vmem:[#allocation2 + $0x20] sm:$0xff]
        %v1224 = vld [vmem:[#allocation2 + $0x28] sm:$0xff]
        %v1225 = vld [vmem:[#allocation2 + $0x30] sm:$0xff]
        %v1226 = vld [vmem:[#allocation2 + $0x38] sm:$0xff]
        %s1227 = scalar_lea.vmem [#allocation4], 224
        %v1228 = vld [vmem:[%s1227] sm:$0xff]
        %v1229 = vld [vmem:[%s1227 + $0x8] sm:$0xff]
        %1238 = vrot.lane.b32.xlu0 %v1219, 114
        %v1239 = vpop.permute.xlu0 %1238
        %1240 = vrot.lane.b32.xlu0 %v1220, 114
        %v1241 = vpop.permute.xlu0 %1240
        %1242 = vrot.lane.b32.xlu0 %v1221, 114
        %v1243 = vpop.permute.xlu0 %1242
        %1244 = vrot.lane.b32.xlu0 %v1222, 114
        %v1245 = vpop.permute.xlu0 %1244
        %1246 = vrot.lane.b32.xlu0 %v1223, 114
        %v1247 = vpop.permute.xlu0 %1246
        %1248 = vrot.lane.b32.xlu0 %v1224, 114
        %v1249 = vpop.permute.xlu0 %1248
        %1250 = vrot.lane.b32.xlu0 %v1225, 114
        %v1251 = vpop.permute.xlu0 %1250
        %1252 = vrot.lane.b32.xlu0 %v1226, 114
        %v1253 = vpop.permute.xlu0 %1252
        %vm1254 = vcmask 932864
        %v1255 = vsel %vm1254, %v1239, %v1241
        %v1256 = vsel %vm1254, %v1243, %v1245
        %v1257 = vsel %vm1254, %v1247, %v1249
        %v1258 = vsel %vm1254, %v1251, %v1253
        %v1264 = vsel %vm160, %v1228, 0
        %v1267 = vsel %vm160, %v1229, 0
        %1269 = vmatpush.msra.mxu0 0.0
        %1270 = vmatpush.msra.mxu0 0.0
        %1271 = vmatpush.msra.mxu0 0.0
        %1272 = vmatpush.msra.mxu0 0.0
        %1273 = vmatpush.msra.mxu0 0.0
        %1274 = vmatpush.msra.mxu0 0.0
        %1275 = vmatpush.msra.mxu0 0.0
        %1276 = vmatpush.msra.mxu0 0.0
        %1277 = vmatpush.msra.mxu0 0.0
        %1278 = vmatpush.msra.mxu0 0.0
        %1279 = vmatpush.msra.mxu0 0.0
        %1280 = vmatpush.msra.mxu0 0.0
        %1281 = vmatpush.msra.mxu0 %v1258
        %1282 = vmatpush.msra.mxu0 %v1257
        %1283 = vmatpush.msra.mxu0 %v1256
        %1284 = vmatpush.msra.mxu0 %v1255
        %1285 = vmatmul.f32.gmra.mxu0 %v1264
        %v1286 = vpop.f32.mrf.mxu0
        %v1287 = vadd.f32 0.0, %v1286
        %1288 = vmatmul.f32.gmra.mxu0 %v1267
        %v1289 = vpop.f32.mrf.mxu0
        %v1290 = vadd.f32 0.0, %v1289
        %1291 = vdwg.mxu0
        %v1292 = vld [vmem:[%s126] sm:$0xff]
        %v1293 = vld [vmem:[%s126 + $0x8] sm:$0xff]
        %v1294 = vadd.f32 %v1292, %v1287
        %v1295 = vadd.f32 %v1293, %v1290
        %1296 = vst [vmem:[%s126] sm:$0xff] %v1294
        %1297 = vst [vmem:[%s126 + $0x8] sm:$0xff] %v1295
        %v1298 = vld [vmem:[#allocation2] sm:$0xff]
        %v1299 = vld [vmem:[#allocation2 + $0x8] sm:$0xff]
        %v1300 = vld [vmem:[#allocation2 + $0x10] sm:$0xff]
        %v1301 = vld [vmem:[#allocation2 + $0x18] sm:$0xff]
        %v1302 = vld [vmem:[#allocation2 + $0x20] sm:$0xff]
        %v1303 = vld [vmem:[#allocation2 + $0x28] sm:$0xff]
        %v1304 = vld [vmem:[#allocation2 + $0x30] sm:$0xff]
        %v1305 = vld [vmem:[#allocation2 + $0x38] sm:$0xff]
        %s1306 = scalar_lea.vmem [#allocation4], 240
        %v1307 = vld [vmem:[%s1306] sm:$0xff]
        %v1308 = vld [vmem:[%s1306 + $0x8] sm:$0xff]
        %1317 = vrot.lane.b32.xlu0 %v1298, 113
        %v1318 = vpop.permute.xlu0 %1317
        %1319 = vrot.lane.b32.xlu0 %v1299, 113
        %v1320 = vpop.permute.xlu0 %1319
        %1321 = vrot.lane.b32.xlu0 %v1300, 113
        %v1322 = vpop.permute.xlu0 %1321
        %1323 = vrot.lane.b32.xlu0 %v1301, 113
        %v1324 = vpop.permute.xlu0 %1323
        %1325 = vrot.lane.b32.xlu0 %v1302, 113
        %v1326 = vpop.permute.xlu0 %1325
        %1327 = vrot.lane.b32.xlu0 %v1303, 113
        %v1328 = vpop.permute.xlu0 %1327
        %1329 = vrot.lane.b32.xlu0 %v1304, 113
        %v1330 = vpop.permute.xlu0 %1329
        %1331 = vrot.lane.b32.xlu0 %v1305, 113
        %v1332 = vpop.permute.xlu0 %1331
        %vm1333 = vcmask 924672
        %v1334 = vsel %vm1333, %v1318, %v1320
        %v1335 = vsel %vm1333, %v1322, %v1324
        %v1336 = vsel %vm1333, %v1326, %v1328
        %v1337 = vsel %vm1333, %v1330, %v1332
        %v1343 = vsel %vm160, %v1307, 0
        %v1346 = vsel %vm160, %v1308, 0
        %1348 = vmatpush.msra.mxu0 0.0
        %1349 = vmatpush.msra.mxu0 0.0
        %1350 = vmatpush.msra.mxu0 0.0
        %1351 = vmatpush.msra.mxu0 0.0
        %1352 = vmatpush.msra.mxu0 0.0
        %1353 = vmatpush.msra.mxu0 0.0
        %1354 = vmatpush.msra.mxu0 0.0
        %1355 = vmatpush.msra.mxu0 0.0
        %1356 = vmatpush.msra.mxu0 0.0
        %1357 = vmatpush.msra.mxu0 0.0
        %1358 = vmatpush.msra.mxu0 0.0
        %1359 = vmatpush.msra.mxu0 0.0
        %1360 = vmatpush.msra.mxu0 %v1337
        %1361 = vmatpush.msra.mxu0 %v1336
        %1362 = vmatpush.msra.mxu0 %v1335
        %1363 = vmatpush.msra.mxu0 %v1334
        %1364 = vmatmul.f32.gmra.mxu0 %v1343
        %v1365 = vpop.f32.mrf.mxu0
        %v1366 = vadd.f32 0.0, %v1365
        %1367 = vmatmul.f32.gmra.mxu0 %v1346
        %v1368 = vpop.f32.mrf.mxu0
        %v1369 = vadd.f32 0.0, %v1368
        %1370 = vdwg.mxu0
        %v1371 = vld [vmem:[%s126] sm:$0xff]
        %v1372 = vld [vmem:[%s126 + $0x8] sm:$0xff]
        %v1373 = vadd.f32 %v1371, %v1366
        %v1374 = vadd.f32 %v1372, %v1369
        %1375 = vst [vmem:[%s126] sm:$0xff] %v1373
        %1376 = vst [vmem:[%s126 + $0x8] sm:$0xff] %v1374
        %v1377 = vld [vmem:[#allocation2] sm:$0xff]
        %v1378 = vld [vmem:[#allocation2 + $0x8] sm:$0xff]
        %v1379 = vld [vmem:[#allocation2 + $0x10] sm:$0xff]
        %v1380 = vld [vmem:[#allocation2 + $0x18] sm:$0xff]
        %v1381 = vld [vmem:[#allocation2 + $0x20] sm:$0xff]
        %v1382 = vld [vmem:[#allocation2 + $0x28] sm:$0xff]
        %v1383 = vld [vmem:[#allocation2 + $0x30] sm:$0xff]
        %v1384 = vld [vmem:[#allocation2 + $0x38] sm:$0xff]
        %s1385 = scalar_lea.vmem [#allocation4], 256
        %v1386 = vld [vmem:[%s1385] sm:$0xff]
        %v1387 = vld [vmem:[%s1385 + $0x8] sm:$0xff]
        %1396 = vrot.lane.b32.xlu0 %v1377, 112
        %v1397 = vpop.permute.xlu0 %1396
        %1398 = vrot.lane.b32.xlu0 %v1378, 112
        %v1399 = vpop.permute.xlu0 %1398
        %1400 = vrot.lane.b32.xlu0 %v1379, 112
        %v1401 = vpop.permute.xlu0 %1400
        %1402 = vrot.lane.b32.xlu0 %v1380, 112
        %v1403 = vpop.permute.xlu0 %1402
        %1404 = vrot.lane.b32.xlu0 %v1381, 112
        %v1405 = vpop.permute.xlu0 %1404
        %1406 = vrot.lane.b32.xlu0 %v1382, 112
        %v1407 = vpop.permute.xlu0 %1406
        %1408 = vrot.lane.b32.xlu0 %v1383, 112
        %v1409 = vpop.permute.xlu0 %1408
        %1410 = vrot.lane.b32.xlu0 %v1384, 112
        %v1411 = vpop.permute.xlu0 %1410
        %vm1412 = vcmask 916480
        %v1413 = vsel %vm1412, %v1397, %v1399
        %v1414 = vsel %vm1412, %v1401, %v1403
        %v1415 = vsel %vm1412, %v1405, %v1407
        %v1416 = vsel %vm1412, %v1409, %v1411
        %v1422 = vsel %vm160, %v1386, 0
        %v1425 = vsel %vm160, %v1387, 0
        %1427 = vmatpush.msra.mxu0 0.0
        %1428 = vmatpush.msra.mxu0 0.0
        %1429 = vmatpush.msra.mxu0 0.0
        %1430 = vmatpush.msra.mxu0 0.0
        %1431 = vmatpush.msra.mxu0 0.0
        %1432 = vmatpush.msra.mxu0 0.0
        %1433 = vmatpush.msra.mxu0 0.0
        %1434 = vmatpush.msra.mxu0 0.0
        %1435 = vmatpush.msra.mxu0 0.0
        %1436 = vmatpush.msra.mxu0 0.0
        %1437 = vmatpush.msra.mxu0 0.0
        %1438 = vmatpush.msra.mxu0 0.0
        %1439 = vmatpush.msra.mxu0 %v1416
        %1440 = vmatpush.msra.mxu0 %v1415
        %1441 = vmatpush.msra.mxu0 %v1414
        %1442 = vmatpush.msra.mxu0 %v1413
        %1443 = vmatmul.f32.gmra.mxu0 %v1422
        %v1444 = vpop.f32.mrf.mxu0
        %v1445 = vadd.f32 0.0, %v1444
        %1446 = vmatmul.f32.gmra.mxu0 %v1425
        %v1447 = vpop.f32.mrf.mxu0
        %v1448 = vadd.f32 0.0, %v1447
        %1449 = vdwg.mxu0
        %v1450 = vld [vmem:[%s126] sm:$0xff]
        %v1451 = vld [vmem:[%s126 + $0x8] sm:$0xff]
        %v1452 = vadd.f32 %v1450, %v1445
        %v1453 = vadd.f32 %v1451, %v1448
        %1454 = vst [vmem:[%s126] sm:$0xff] %v1452
        %1455 = vst [vmem:[%s126 + $0x8] sm:$0xff] %v1453
        %s1456 = sand.u32 %s60, 1
        %s1457 = scalar_lea.sflag [#allocation6], %s1456
        %s1458 = sand.u32 %s60, 1
        %s1459 = smul.addr %s1458, 16
        %s1460 = scalar_lea.vmem [#allocation7], %s1459
        // Predicated region
        $region33: #{tpu_custom_call.1} parent=23 // pred_check
          %p1461 = pneg %p70
        $region34: #{tpu_custom_call.1} parent=23 // pred_check_branch
          %1463 = sbr.rel (%p1461) target = $region36
        $region35: #{tpu_custom_call.1} parent=23 // pred_region
          %s1464 = smul.u32 2, %s22
          %1466 = vsyncadd %s1457, 0
          %s1467 = smul.addr %s21, 2
          %s1468 = sadd.s32 %s1464, %s1467
          %s1469 = smul.addr %s1468, 8
          %s1470 = scalar_lea.hbm %s2, %s1469
          %s1471 = sshll.u32 %s1460, 4
          %s1472 = int_to_ptr.vmem [resolvable:$true] %s1471
          %s1473 = sshll.u32 %s1470, 4
          %s1474 = int_to_ptr.hbm [resolvable:$true] %s1473
          %1479 = dma.vmem_to_hbm [thread:$0]  %s1472, 256, %s1474, %s1457, 128, 128, 8
        $region36: #{tpu_custom_call.1} parent=23 // pred_fallthru
          _
      $region24: #{tpu_custom_call.1} parent=5 // pred_fallthru
        _
      %p1480 = scmp.le.s32.totalorder 2, %s12
      // Predicated region
      $region37: #{tpu_custom_call.1} parent=5 // pred_check
        %p1481 = pneg %p1480
      $region38: #{tpu_custom_call.1} parent=5 // pred_check_branch
        %1483 = sbr.rel (%p1481) target = $region40
      $region39: #{tpu_custom_call.1} parent=5 // pred_region
        %s1484 = ssub.s32 %s12, 2
        // Predicated region
        $region41: #{tpu_custom_call.1} parent=39 // pred_check
          %p1485 = pneg %p76
        $region42: #{tpu_custom_call.1} parent=39 // pred_check_branch
          %1487 = sbr.rel (%p1485) target = $region44
        $region43: #{tpu_custom_call.1} parent=39 // pred_region
          %s1488 = sand.u32 %s61, 1
          %s1489 = scalar_lea.sflag [#allocation6], %s1488
          %s1490 = sand.u32 %s61, 1
          %s1491 = smul.addr %s1490, 16
          %s1492 = scalar_lea.vmem [#allocation7], %s1491
          %1494 = dma.done %s1489, 256
        $region44: #{tpu_custom_call.1} parent=39 // pred_fallthru
          _
      $region40: #{tpu_custom_call.1} parent=5 // pred_fallthru
        _
    $region6: #{tpu_custom_call.1} parent=1 // loop_footer
      %s16 = sadd.s32 1, %s12
    $region7: #{tpu_custom_call.1} parent=1 // loop_footer_branch
      %11 = sbr.rel target = $region3
    $region8: #{tpu_custom_call.1} parent=1 // loop_exit
      _
    %1495 = vsyncpa [#allocation5], 1
    %s1496 = scalar_lea.sflag [#allocation5], 1
    %1497 = vsyncpa %s1496, 1
    %1498 = vsyncpa [#allocation6], 1
    %s1499 = scalar_lea.sflag [#allocation6], 1
    %1500 = vsyncpa %s1499, 1
  %1501 = vsyncmov [#allocation3]
  %s1502 = vpop.sfrf %1501
  %p1503 = scmp.eq.s32.totalorder %s1502, 0
  %p1504 = pneg %p1503
  %1506 = shalt.err (%p1504)

</llo_original>
